<compile_context>
chip_gen: v7x
topology: tpu7x:2x2x1
jax: 0.10.0
libtpu: 0.0.40
codegen_flags: <defaults>
</compile_context>

<pallas_src>
import numpy as np
import jax
import jax.numpy as jnp
from jax.experimental import pallas as pl
from jax.experimental.pallas import tpu as pltpu


def _sine_kernel(x_ref, w_ref, b_ref, o_ref):
    # Hot path: matmul on the MXU; epilogue (bias add + sin) on the VPU.
    acc = jnp.dot(x_ref[...], w_ref[...], preferred_element_type=jnp.float32)
    acc = acc + b_ref[...]                       # (TM, N) + (1, N) broadcast
    o_ref[...] = jnp.sin(acc).astype(o_ref.dtype)


def sine_layer(x, w_t, b, omega_0=30.0, block_m=512):
    """Pallas forward of SineLayer: sin(omega_0 * (x @ w_t + b)).

    x   : (..., K) float32   (batch..., in_features)
    w_t : (K, N)   float32   transposed linear weight (in_features, out_features)
    b   : (N,)     float32   bias
    returns (..., N) float32
    """
    orig_shape = x.shape
    K = orig_shape[-1]
    x2d = x.reshape(-1, K)
    M = x2d.shape[0]
    K2, N = w_t.shape
    assert K == K2, (K, K2)

    # Fold omega_0 into the parameters (once per call; fold at init time if
    # the same layer is applied repeatedly inside a jit).
    w_scaled = (w_t * omega_0).astype(x2d.dtype)
    b_scaled = (b.astype(jnp.float32) * omega_0).reshape(1, N)

    # Row-tile size: multiple of 8 (sublane) when tiling; full M when small.
    tm = min(int(block_m), M)
    if tm < M:
        tm = max(8, (tm // 8) * 8)
    grid_m = pl.cdiv(M, tm)

    # TODO(synk): add a K grid axis ("arbitrary", f32 VMEM accumulator) if
    # in_features grows large enough that the (TM, K) + (K, N) blocks
    # pressure VMEM; SIREN layers are small so K stays whole here.

    cost = pl.CostEstimate(
        flops=2 * M * N * K,
        transcendentals=M * N,
        bytes_accessed=4 * (M * K + K * N + M * N + N),
    )

    out2d = pl.pallas_call(
        _sine_kernel,
        out_shape=jax.ShapeDtypeStruct((M, N), x2d.dtype),
        grid_spec=pltpu.PrefetchScalarGridSpec(
            num_scalar_prefetch=0,
            grid=(grid_m,),
            in_specs=[
                pl.BlockSpec((tm, K), lambda i: (i, 0)),   # x tile streams
                pl.BlockSpec((K, N), lambda i: (0, 0)),    # weight resident
                pl.BlockSpec((1, N), lambda i: (0, 0)),    # bias resident
            ],
            out_specs=pl.BlockSpec((tm, N), lambda i: (i, 0)),
        ),
        compiler_params=pltpu.CompilerParams(
            dimension_semantics=("parallel",),             # megacore-friendly
        ),
        cost_estimate=cost,
    )(x2d, w_scaled, b_scaled)

    return out2d.reshape(orig_shape[:-1] + (N,))


def init_sine_layer_params(key, in_features, out_features, is_first=False,
                           omega_0=30.0):
    """Deterministic init mirroring SineLayer.init_weights (+ default bias init)."""
    kw, kb = jax.random.split(key)
    if is_first:
        bound = 1.0 / in_features
    else:
        bound = np.sqrt(6.0 / in_features) / omega_0
    # PyTorch weight is (out, in); we store its transpose (in, out).
    w_t = jax.random.uniform(kw, (in_features, out_features),
                             minval=-bound, maxval=bound, dtype=jnp.float32)
    # nn.Linear default bias init: U(-1/sqrt(in), 1/sqrt(in))
    b_bound = 1.0 / np.sqrt(in_features)
    b = jax.random.uniform(kb, (out_features,),
                           minval=-b_bound, maxval=b_bound, dtype=jnp.float32)
    return w_t, b


if __name__ == "__main__":
    key = jax.random.PRNGKey(0)
    k_x, k_p = jax.random.split(key)

    batch = 512          # coordinate rows (SIREN-style input)
    in_features = 64
    out_features = 128   # lane-dense output (multiple of 128)
    omega_0 = 30.0
    is_first = True

    x = jax.random.uniform(k_x, (batch, in_features),
                           minval=-1.0, maxval=1.0, dtype=jnp.float32)
    w_t, b = init_sine_layer_params(k_p, in_features, out_features,
                                    is_first=is_first, omega_0=omega_0)

    # block_m=128 so the small demo still exercises a multi-step grid (4 tiles).
    out = sine_layer(x, w_t, b, omega_0=omega_0, block_m=128)
    out = jax.block_until_ready(out)

    # Reference check in plain JAX (original, un-folded formulation).
    ref = jnp.sin(omega_0 * (x @ w_t + b[None, :]))
    np.testing.assert_allclose(np.asarray(out), np.asarray(ref),
                               rtol=1e-4, atol=1e-4)

    print("KERNEL_OK")
</pallas_src>

<mosaic_0001>
module attributes {stable_mosaic.version = 11 : i64} {
  func.func @_sine_kernel(%arg0: i32, %arg1: memref<128x64xf32, #tpu.memory_space<vmem>>, %arg2: memref<64x128xf32, #tpu.memory_space<vmem>>, %arg3: memref<1x128xf32, #tpu.memory_space<vmem>>, %arg4: memref<128x128xf32, #tpu.memory_space<vmem>>) attributes {dimension_semantics = [#tpu.dimension_semantics<parallel>], iteration_bounds = array<i64: 4>, scalar_prefetch = 0 : i64, scratch_operands = 0 : i64, tpu.core_type = #tpu.core_type<tc>, window_params = [{transform_indices = @transform_0, window_bounds = array<i64: 128, 64>}, {pipeline_mode = #tpu.pipeline_mode<synchronous>, transform_indices = @transform_1, window_bounds = array<i64: 64, 128>}, {pipeline_mode = #tpu.pipeline_mode<synchronous>, transform_indices = @transform_2, window_bounds = array<i64: 1, 128>}, {transform_indices = @transform_3, window_bounds = array<i64: 128, 128>}]} {
    %c0 = arith.constant 0 : index
    %c0_0 = arith.constant 0 : index
    %0 = vector.load %arg1[%c0, %c0_0] : memref<128x64xf32, #tpu.memory_space<vmem>>, vector<128x64xf32>
    %c0_1 = arith.constant 0 : index
    %c0_2 = arith.constant 0 : index
    %1 = vector.load %arg2[%c0_1, %c0_2] : memref<64x128xf32, #tpu.memory_space<vmem>>, vector<64x128xf32>
    %cst = arith.constant dense<0.000000e+00> : vector<128x128xf32>
    %2 = tpu.matmul %0, %1, %cst {dimension_numbers = #tpu.dot_dimension_numbers<[1], [0], [0], [1], [0, 0, 1, 1], [], []>} : vector<128x64xf32>, vector<64x128xf32>, vector<128x128xf32> -> vector<128x128xf32>
    %c0_3 = arith.constant 0 : index
    %c0_4 = arith.constant 0 : index
    %3 = vector.load %arg3[%c0_3, %c0_4] : memref<1x128xf32, #tpu.memory_space<vmem>>, vector<1x128xf32>
    %4 = vector.broadcast %3 : vector<1x128xf32> to vector<128x128xf32>
    %5 = arith.addf %2, %4 : vector<128x128xf32>
    %6 = math.sin %5 : vector<128x128xf32>
    %c0_5 = arith.constant 0 : index
    %c0_6 = arith.constant 0 : index
    %7 = vector.load %arg4[%c0_5, %c0_6] : memref<128x128xf32, #tpu.memory_space<vmem>>, vector<128x128xf32>
    tpu.vector_store %arg4[%c0_5, %c0_6], %6 {strides = array<i32>} : memref<128x128xf32, #tpu.memory_space<vmem>>, vector<128x128xf32>,
    return
  }
  func.func @transform_0(%arg0: i32) -> (i32, i32) {
    %c0_i32 = arith.constant 0 : i32
    %c0_i32_0 = arith.constant 0 : i32
    return %arg0, %c0_i32 : i32, i32
  }
  func.func @transform_1(%arg0: i32) -> (i32, i32) {
    %c0_i32 = arith.constant 0 : i32
    %c0_i32_0 = arith.constant 0 : i32
    %c0_i32_1 = arith.constant 0 : i32
    return %c0_i32, %c0_i32_0 : i32, i32
  }
  func.func @transform_2(%arg0: i32) -> (i32, i32) {
    %c0_i32 = arith.constant 0 : i32
    %c0_i32_0 = arith.constant 0 : i32
    %c0_i32_1 = arith.constant 0 : i32
    return %c0_i32, %c0_i32_0 : i32, i32
  }
  func.func @transform_3(%arg0: i32) -> (i32, i32) {
    %c0_i32 = arith.constant 0 : i32
    %c0_i32_0 = arith.constant 0 : i32
    return %arg0, %c0_i32 : i32, i32
  }
}

</mosaic_0001>

<llo_original>
// kernel: tpu_custom_call.1
$region0: #{tpu_custom_call.1}
  #allocation0 [shape = 'u32[]', space=smem, size = 0x4, offset = 0x4, fixed_abs, tag = 'smem constant byte address 0x4 - core index']
  #allocation1 [shape = 'u32[144,128]{1,0:T(1,128)}', space=vmem, size = 0x12000, scoped, tag = 'internal scratch']
  %s0 = inlined_call_operand.vmem [shape: f32[512,64], index: 0, kind: input, shape index: {}]
  %s1 = inlined_call_operand.vmem [shape: f32[64,128], index: 1, kind: input, shape index: {}]
  %s2 = inlined_call_operand.vmem [shape: f32[1,128], index: 2, kind: input, shape index: {}]
  %s3 = inlined_call_operand.hbm [shape: f32[512,128], index: 3, kind: output, shape index: {}]
  %s4 = sld [smem:[#allocation0]]
  $region45: #{tpu_custom_call.1} parent=0
    _
  %s6 = ssub.s32 1, %s4
  %s7 = scalar_select 0, %s6, %s4
  $region1: #{tpu_custom_call.1} parent=0
    #allocation2 [shape = 'u8[131072]{0}', space=vmem, size = 0x20000, scoped, tag = 'output window, operand 0']
    #allocation3 [shape = 's32[2]{0}', space=sflag, size = 0x8, scoped, tag = 'scoped memory for tpu_custom_call.1']
    %8 = vsyncpa [#allocation3], 0
    %s9 = scalar_lea.sflag [#allocation3], 1
    %10 = vsyncpa %s9, 0
    loop: start=0, step=1, limit=6
    $region2: #{tpu_custom_call.1} parent=1 // loop_pre_header
      _
    $region3: #{tpu_custom_call.1} parent=1 // loop_header
      %s12 = sphi 0, %s16
      %p13 = scmp.ge.s32.totalorder %s12, 6
      %s22 = sphi 0, %s24
      %s25 = sphi 0, %s22
      %s26 = sphi 0, %s25
      %s42 = sphi 0, %s26
      %s46 = sphi 0, %s46
      %s48 = sphi 0, %s46
      %s49 = sphi 0, %s48
      %s63 = sphi 0, %s49
      %s67 = sphi 0, %s67
      %s69 = sphi 0, %s67
      %s70 = sphi 0, %s69
      %s84 = sphi 0, %s70
      %s90 = sphi 0, %s92
      %s93 = sphi 0, %s90
      %s94 = sphi 0, %s93
      %s110 = sphi 0, %s94
    $region4: #{tpu_custom_call.1} parent=1 // loop_header_branch
      %15 = sbr.rel (%p13) target = $region8
    $region5: #{tpu_custom_call.1} parent=1 // loop_body
      %s17 = ssub.s32 %s12, 1
      %s18 = ssub.s32 %s12, 2
      %s19 = sadd.s32 %s12, 1
      %s20 = ssub.s32 %s12, %s19
      %p21 = scmp.eq.s32.totalorder %s20, 0
      %s23 = sadd.s32 %s22, 1
      %s24 = scalar_select %p21, %s22, %s23
      %p27 = pneg %p21
      %p28 = scmp.eq.s32.totalorder %s12, 3
      %p29 = por %p27, %p28
      %p30 = scmp.ne.s32.totalorder %s22, %s25
      %p31 = scmp.eq.s32.totalorder %s12, 0
      %p32 = por %p30, %p31
      %p33 = scmp.ne.s32.totalorder %s22, %s25
      %p34 = scmp.eq.s32.totalorder %s17, 3
      %p35 = por %p33, %p34
      %p36 = scmp.ne.s32.totalorder %s25, %s26
      %p37 = scmp.eq.s32.totalorder %s17, 0
      %p38 = por %p36, %p37
      %p39 = scmp.ne.s32.totalorder %s25, %s26
      %p40 = scmp.eq.s32.totalorder %s18, 3
      %p41 = por %p39, %p40
      %p43 = scmp.ne.s32.totalorder %s26, %s42
      %p44 = scmp.eq.s32.totalorder %s18, 0
      %p45 = por %p43, %p44
      %s47 = sadd.s32 %s46, 1
      %p50 = scmp.eq.s32.totalorder %s12, 3
      %p51 = scmp.ne.s32.totalorder %s46, %s48
      %p52 = scmp.eq.s32.totalorder %s12, 0
      %p53 = por %p51, %p52
      %p54 = scmp.ne.s32.totalorder %s46, %s48
      %p55 = scmp.eq.s32.totalorder %s17, 3
      %p56 = por %p54, %p55
      %p57 = scmp.ne.s32.totalorder %s48, %s49
      %p58 = scmp.eq.s32.totalorder %s17, 0
      %p59 = por %p57, %p58
      %p60 = scmp.ne.s32.totalorder %s48, %s49
      %p61 = scmp.eq.s32.totalorder %s18, 3
      %p62 = por %p60, %p61
      %p64 = scmp.ne.s32.totalorder %s49, %s63
      %p65 = scmp.eq.s32.totalorder %s18, 0
      %p66 = por %p64, %p65
      %s68 = sadd.s32 %s67, 1
      %p71 = scmp.eq.s32.totalorder %s12, 3
      %p72 = scmp.ne.s32.totalorder %s67, %s69
      %p73 = scmp.eq.s32.totalorder %s12, 0
      %p74 = por %p72, %p73
      %p75 = scmp.ne.s32.totalorder %s67, %s69
      %p76 = scmp.eq.s32.totalorder %s17, 3
      %p77 = por %p75, %p76
      %p78 = scmp.ne.s32.totalorder %s69, %s70
      %p79 = scmp.eq.s32.totalorder %s17, 0
      %p80 = por %p78, %p79
      %p81 = scmp.ne.s32.totalorder %s69, %s70
      %p82 = scmp.eq.s32.totalorder %s18, 3
      %p83 = por %p81, %p82
      %p85 = scmp.ne.s32.totalorder %s70, %s84
      %p86 = scmp.eq.s32.totalorder %s18, 0
      %p87 = por %p85, %p86
      %s88 = ssub.s32 %s12, %s19
      %p89 = scmp.eq.s32.totalorder %s88, 0
      %s91 = sadd.s32 %s90, 1
      %s92 = scalar_select %p89, %s90, %s91
      %p95 = pneg %p89
      %p96 = scmp.eq.s32.totalorder %s12, 3
      %p97 = por %p95, %p96
      %p98 = scmp.ne.s32.totalorder %s90, %s93
      %p99 = scmp.eq.s32.totalorder %s12, 0
      %p100 = por %p98, %p99
      %p101 = scmp.ne.s32.totalorder %s90, %s93
      %p102 = scmp.eq.s32.totalorder %s17, 3
      %p103 = por %p101, %p102
      %p104 = scmp.ne.s32.totalorder %s93, %s94
      %p105 = scmp.eq.s32.totalorder %s17, 0
      %p106 = por %p104, %p105
      %p107 = scmp.ne.s32.totalorder %s93, %s94
      %p108 = scmp.eq.s32.totalorder %s18, 3
      %p109 = por %p107, %p108
      %p111 = scmp.ne.s32.totalorder %s94, %s110
      %p112 = scmp.eq.s32.totalorder %s18, 0
      %p113 = por %p111, %p112
      %p114 = scmp.le.s32.totalorder 1, %s12
      %p115 = scmp.lt.s32.totalorder %s12, 5
      %p116 = pnand %p114, %p115
      %p117 = pneg %p116
      // Predicated region
      $region9: #{tpu_custom_call.1} parent=5 // pred_check
        _
      $region10: #{tpu_custom_call.1} parent=5 // pred_check_branch
        %119 = sbr.rel (%p116) target = $region12
      $region11: #{tpu_custom_call.1} parent=5 // pred_region
        %s120 = ssub.s32 %s12, 1
        // Predicated region
        $region13: #{tpu_custom_call.1} parent=11 // pred_check
          %p121 = pneg %p59
        $region14: #{tpu_custom_call.1} parent=11 // pred_check_branch
          %123 = sbr.rel (%p121) target = $region16
        $region15: #{tpu_custom_call.1} parent=11 // pred_region
          _
        $region16: #{tpu_custom_call.1} parent=11 // pred_fallthru
          _
        // Predicated region
        $region17: #{tpu_custom_call.1} parent=11 // pred_check
          %p124 = pneg %p80
        $region18: #{tpu_custom_call.1} parent=11 // pred_check_branch
          %126 = sbr.rel (%p124) target = $region20
        $region19: #{tpu_custom_call.1} parent=11 // pred_region
          _
        $region20: #{tpu_custom_call.1} parent=11 // pred_fallthru
          _
      $region12: #{tpu_custom_call.1} parent=5 // pred_fallthru
        _
      %p127 = scmp.lt.s32.totalorder %s12, 4
      // Predicated region
      $region21: #{tpu_custom_call.1} parent=5 // pred_check
        %p128 = pneg %p127
      $region22: #{tpu_custom_call.1} parent=5 // pred_check_branch
        %130 = sbr.rel (%p128) target = $region24
      $region23: #{tpu_custom_call.1} parent=5 // pred_region
        // Predicated region
        $region25: #{tpu_custom_call.1} parent=23 // pred_check
          %p131 = pneg %p32
        $region26: #{tpu_custom_call.1} parent=23 // pred_check_branch
          %133 = sbr.rel (%p131) target = $region28
        $region27: #{tpu_custom_call.1} parent=23 // pred_region
          %s134 = smul.u32 16, %s12
          %p135 = scmp.lt.s32.totalorder %s134, 63
          %s136 = scalar_select %p135, %s134, 63
          %s137 = smul.addr %s136, 8
          %s138 = scalar_lea.vmem %s0, %s137
          %s139 = smul.u32 16, %s12
        $region28: #{tpu_custom_call.1} parent=23 // pred_fallthru
          _
      $region24: #{tpu_custom_call.1} parent=5 // pred_fallthru
        _
      %p140 = scmp.le.s32.totalorder 1, %s12
      %p141 = scmp.lt.s32.totalorder %s12, 5
      %p142 = pnand %p140, %p141
      %p143 = pneg %p142
      // Predicated region
      $region29: #{tpu_custom_call.1} parent=5 // pred_check
        _
      $region30: #{tpu_custom_call.1} parent=5 // pred_check_branch
        %145 = sbr.rel (%p142) target = $region32
      $region31: #{tpu_custom_call.1} parent=5 // pred_region
        %s146 = ssub.s32 %s12, 1
        %s147 = smul.u32 16, %s17
        %p148 = scmp.lt.s32.totalorder %s147, 63
        %s149 = scalar_select %p148, %s147, 63
        %s150 = smul.addr %s149, 8
        %s151 = scalar_lea.vmem %s0, %s150
        %p152 = pneg %p38
        %p153 = pneg %p35
        %p154 = pneg %p59
        %p155 = pneg %p56
        %p156 = pneg %p80
        %p157 = pneg %p77
        %p158 = pneg %p106
        %p159 = pneg %p103
        %s160 = sand.u32 %s93, 1
        %s161 = scalar_lea.sflag [#allocation3], %s160
        %s162 = sand.u32 %s93, 1
        %s163 = smul.addr %s162, 128
        %s164 = scalar_lea.vmem [#allocation2], %s163
        %s165 = smul.u32 16, %s17
        %p166 = scmp.lt.s32.totalorder %s165, 63
        %s167 = scalar_select %p166, %s165, 63
        %s168 = smul.addr %s167, 8
        %s169 = scalar_lea.vmem %s0, %s168
        %s170 = smul.u32 16, %s17
        %s171 = smul.u32 16, %s17
        %v172 = vld [vmem:[%s169] sm:$0xff]
        %v173 = vld [vmem:[%s169 + $0x8] sm:$0xff]
        %v174 = vld [vmem:[%s169 + $0x10] sm:$0xff]
        %v175 = vld [vmem:[%s169 + $0x18] sm:$0xff]
        %v176 = vld [vmem:[%s169 + $0x20] sm:$0xff]
        %v177 = vld [vmem:[%s169 + $0x28] sm:$0xff]
        %v178 = vld [vmem:[%s169 + $0x30] sm:$0xff]
        %v179 = vld [vmem:[%s169 + $0x38] sm:$0xff]
        %v180 = vld [vmem:[%s169 + $0x40] sm:$0xff]
        %v181 = vld [vmem:[%s169 + $0x48] sm:$0xff]
        %v182 = vld [vmem:[%s169 + $0x50] sm:$0xff]
        %v183 = vld [vmem:[%s169 + $0x58] sm:$0xff]
        %v184 = vld [vmem:[%s169 + $0x60] sm:$0xff]
        %v185 = vld [vmem:[%s169 + $0x68] sm:$0xff]
        %v186 = vld [vmem:[%s169 + $0x70] sm:$0xff]
        %v187 = vld [vmem:[%s169 + $0x78] sm:$0xff]
        %v188 = vld [vmem:[%s1] sm:$0xff]
        %v189 = vld [vmem:[%s1 + $0x8] sm:$0xff]
        %v190 = vld [vmem:[%s1 + $0x10] sm:$0xff]
        %v191 = vld [vmem:[%s1 + $0x18] sm:$0xff]
        %v192 = vld [vmem:[%s1 + $0x20] sm:$0xff]
        %v193 = vld [vmem:[%s1 + $0x28] sm:$0xff]
        %v194 = vld [vmem:[%s1 + $0x30] sm:$0xff]
        %v195 = vld [vmem:[%s1 + $0x38] sm:$0xff]
        %v196 = vld [vmem:[%s2] sm:$0x1]
        %v198 = vlaneseq
        %v199 = vshrl.u32 %v198, 7
        %v200 = vsub.s32 0, %v199
        %v201 = vrot.slane %v196, %v200
        %vm203 = vcmask 523264
        %v205 = vsel %vm203, %v172, 0
        %v208 = vsel %vm203, %v173, 0
        %v211 = vsel %vm203, %v174, 0
        %v214 = vsel %vm203, %v175, 0
        %v217 = vsel %vm203, %v176, 0
        %v220 = vsel %vm203, %v177, 0
        %v223 = vsel %vm203, %v178, 0
        %v226 = vsel %vm203, %v179, 0
        %v229 = vsel %vm203, %v180, 0
        %v232 = vsel %vm203, %v181, 0
        %v235 = vsel %vm203, %v182, 0
        %v238 = vsel %vm203, %v183, 0
        %v241 = vsel %vm203, %v184, 0
        %v244 = vsel %vm203, %v185, 0
        %v247 = vsel %vm203, %v186, 0
        %v250 = vsel %vm203, %v187, 0
        %252 = vmatprep.subr.mxu0 0.0
        %253 = vmatpush1.msra.mxu0 %v188
        %254 = vmatprep.subr.mxu0 0.0
        %255 = vmatpush1.msra.mxu0 %v189
        %256 = vmatprep.subr.mxu0 0.0
        %257 = vmatpush1.msra.mxu0 %v190
        %258 = vmatprep.subr.mxu0 0.0
        %259 = vmatpush1.msra.mxu0 %v191
        %260 = vmatprep.subr.mxu0 0.0
        %261 = vmatpush1.msra.mxu0 %v192
        %262 = vmatprep.subr.mxu0 0.0
        %263 = vmatpush1.msra.mxu0 %v193
        %264 = vmatprep.subr.mxu0 0.0
        %265 = vmatpush1.msra.mxu0 %v194
        %266 = vmatprep.subr.mxu0 0.0
        %267 = vmatpush1.msra.mxu0 %v195
        %268 = vmatprep.subr.mxu0 0.0
        %269 = vmatpush1.msra.mxu0 0.0
        %270 = vmatprep.subr.mxu0 0.0
        %271 = vmatpush1.msra.mxu0 0.0
        %272 = vmatprep.subr.mxu0 0.0
        %273 = vmatpush1.msra.mxu0 0.0
        %274 = vmatprep.subr.mxu0 0.0
        %275 = vmatpush1.msra.mxu0 0.0
        %276 = vmatprep.subr.mxu0 0.0
        %277 = vmatpush1.msra.mxu0 0.0
        %278 = vmatprep.subr.mxu0 0.0
        %279 = vmatpush1.msra.mxu0 0.0
        %280 = vmatprep.subr.mxu0 0.0
        %281 = vmatpush1.msra.mxu0 0.0
        %282 = vmatprep.subr.mxu0 0.0
        %283 = vmatpush1.msra.mxu0 0.0
        %284 = vmatprep.subr.mxu0 0.0
        %285 = vmatpush1.msra.mxu0 0.0
        %286 = vmatprep.subr.mxu0 0.0
        %287 = vmatpush1.msra.mxu0 0.0
        %288 = vmatprep.subr.mxu0 0.0
        %289 = vmatpush1.msra.mxu0 0.0
        %290 = vmatprep.subr.mxu0 0.0
        %291 = vmatpush1.msra.mxu0 0.0
        %292 = vmatprep.subr.mxu0 0.0
        %293 = vmatpush1.msra.mxu0 0.0
        %294 = vmatprep.subr.mxu0 0.0
        %295 = vmatpush1.msra.mxu0 0.0
        %296 = vmatprep.subr.mxu0 0.0
        %297 = vmatpush1.msra.mxu0 0.0
        %298 = vmatprep.subr.mxu0 0.0
        %299 = vmatpush1.msra.mxu0 0.0
        %300 = vmatprep.subr.mxu0 0.0
        %301 = vmatpush1.msra.mxu0 0.0
        %302 = vmatprep.subr.mxu0 0.0
        %303 = vmatpush1.msra.mxu0 0.0
        %304 = vmatprep.subr.mxu0 0.0
        %305 = vmatpush1.msra.mxu0 0.0
        %306 = vmatprep.subr.mxu0 0.0
        %307 = vmatpush1.msra.mxu0 0.0
        %308 = vmatprep.subr.mxu0 0.0
        %309 = vmatpush1.msra.mxu0 0.0
        %310 = vmatprep.subr.mxu0 0.0
        %311 = vmatpush1.msra.mxu0 0.0
        %312 = vmatprep.subr.mxu0 0.0
        %313 = vmatpush1.msra.mxu0 0.0
        %314 = vmatprep.subr.mxu0 0.0
        %315 = vmatpush1.msra.mxu0 0.0
        %316 = vmatprep.mubr.f32.mxu0 0.0
        %317 = vmatmul.mubr.f32.gmra.mrb[0].mxu0 %v205
        %v318 = vpop.f32.mrb[0].mxu0
        %v319 = vadd.f32 %v201, %v318
        %v320 = vpop.f32.mrb[0].mxu0
        %321 = vmatprep.mubr.f32.mxu0 0.0
        %322 = vmatmul.mubr.f32.gmra.mrb[0].mxu0 %v208
        %v323 = vpop.f32.mrb[0].mxu0
        %v324 = vadd.f32 %v201, %v323
        %v325 = vpop.f32.mrb[0].mxu0
        %326 = vmatprep.mubr.f32.mxu0 0.0
        %327 = vmatmul.mubr.f32.gmra.mrb[0].mxu0 %v211
        %v328 = vpop.f32.mrb[0].mxu0
        %v329 = vadd.f32 %v201, %v328
        %v330 = vpop.f32.mrb[0].mxu0
        %331 = vmatprep.mubr.f32.mxu0 0.0
        %332 = vmatmul.mubr.f32.gmra.mrb[0].mxu0 %v214
        %v333 = vpop.f32.mrb[0].mxu0
        %v334 = vadd.f32 %v201, %v333
        %v335 = vpop.f32.mrb[0].mxu0
        %336 = vmatprep.mubr.f32.mxu0 0.0
        %337 = vmatmul.mubr.f32.gmra.mrb[0].mxu0 %v217
        %v338 = vpop.f32.mrb[0].mxu0
        %v339 = vadd.f32 %v201, %v338
        %v340 = vpop.f32.mrb[0].mxu0
        %341 = vmatprep.mubr.f32.mxu0 0.0
        %342 = vmatmul.mubr.f32.gmra.mrb[0].mxu0 %v220
        %v343 = vpop.f32.mrb[0].mxu0
        %v344 = vadd.f32 %v201, %v343
        %v345 = vpop.f32.mrb[0].mxu0
        %346 = vmatprep.mubr.f32.mxu0 0.0
        %347 = vmatmul.mubr.f32.gmra.mrb[0].mxu0 %v223
        %v348 = vpop.f32.mrb[0].mxu0
        %v349 = vadd.f32 %v201, %v348
        %v350 = vpop.f32.mrb[0].mxu0
        %351 = vmatprep.mubr.f32.mxu0 0.0
        %352 = vmatmul.mubr.f32.gmra.mrb[0].mxu0 %v226
        %v353 = vpop.f32.mrb[0].mxu0
        %v354 = vadd.f32 %v201, %v353
        %v355 = vpop.f32.mrb[0].mxu0
        %356 = vmatprep.mubr.f32.mxu0 0.0
        %357 = vmatmul.mubr.f32.gmra.mrb[0].mxu0 %v229
        %v358 = vpop.f32.mrb[0].mxu0
        %v359 = vadd.f32 %v201, %v358
        %v360 = vpop.f32.mrb[0].mxu0
        %361 = vmatprep.mubr.f32.mxu0 0.0
        %362 = vmatmul.mubr.f32.gmra.mrb[0].mxu0 %v232
        %v363 = vpop.f32.mrb[0].mxu0
        %v364 = vadd.f32 %v201, %v363
        %v365 = vpop.f32.mrb[0].mxu0
        %366 = vmatprep.mubr.f32.mxu0 0.0
        %367 = vmatmul.mubr.f32.gmra.mrb[0].mxu0 %v235
        %v368 = vpop.f32.mrb[0].mxu0
        %v369 = vadd.f32 %v201, %v368
        %v370 = vpop.f32.mrb[0].mxu0
        %371 = vmatprep.mubr.f32.mxu0 0.0
        %372 = vmatmul.mubr.f32.gmra.mrb[0].mxu0 %v238
        %v373 = vpop.f32.mrb[0].mxu0
        %v374 = vadd.f32 %v201, %v373
        %v375 = vpop.f32.mrb[0].mxu0
        %376 = vmatprep.mubr.f32.mxu0 0.0
        %377 = vmatmul.mubr.f32.gmra.mrb[0].mxu0 %v241
        %v378 = vpop.f32.mrb[0].mxu0
        %v379 = vadd.f32 %v201, %v378
        %v380 = vpop.f32.mrb[0].mxu0
        %381 = vmatprep.mubr.f32.mxu0 0.0
        %382 = vmatmul.mubr.f32.gmra.mrb[0].mxu0 %v244
        %v383 = vpop.f32.mrb[0].mxu0
        %v384 = vadd.f32 %v201, %v383
        %v385 = vpop.f32.mrb[0].mxu0
        %386 = vmatprep.mubr.f32.mxu0 0.0
        %387 = vmatmul.mubr.f32.gmra.mrb[0].mxu0 %v247
        %v388 = vpop.f32.mrb[0].mxu0
        %v389 = vadd.f32 %v201, %v388
        %v390 = vpop.f32.mrb[0].mxu0
        %391 = vmatprep.mubr.f32.mxu0 0.0
        %392 = vmatmul.mubr.f32.gmra.mrb[0].mxu0 %v250
        %v393 = vpop.f32.mrb[0].mxu0
        %v394 = vadd.f32 %v201, %v393
        %v395 = vpop.f32.mrb[0].mxu0
        %396 = vdwg.mxu0
        %v397 = vand.u32 2147483647, %v319
        %vm398 = vcmp.le.f32.partialorder %v397, 0.7853982
        %vm399 = vcmp.lt.s32.totalorder %v319, 0
        %v400 = vand.u32 %v319, 2139095040
        %v401 = vshrl.u32 %v400, 23
        %v402 = vsub.s32 %v401, 127
        %v403 = vand.u32 2147483647, %v319
        %v404 = vand.u32 %v403, 8388607
        %v405 = vor.u32 %v404, 8388608
        %v406 = vsub.s32 0, %v405
        %v407 = vadd.s32 %v402, 1
        %vm408 = vcmp.gt.s32.totalorder %v407, 0
        %v409 = vsel %vm408, %v407, 0
        %v410 = vshrl.u32 %v409, 5
        %v411 = vand.u32 %v409, 31
        %v412 = vsub.s32 32, %v411
        %v413 = vshrl.u32 683565275, %v412
        %v414 = vshll.u32 683565275, %v411
        %v415 = vshrl.u32 2475754826, %v412
        %v416 = vor.u32 %v414, %v415
        %v417 = vshll.u32 2475754826, %v411
        %v418 = vshrl.u32 2131351028, %v412
        %v419 = vor.u32 %v417, %v418
        %v420 = vshll.u32 2131351028, %v411
        %v421 = vshrl.u32 2102212464, %v412
        %v422 = vor.u32 %v420, %v421
        %v423 = vshll.u32 2102212464, %v411
        %v424 = vshrl.u32 920167782, %v412
        %v425 = vor.u32 %v423, %v424
        %v426 = vshll.u32 920167782, %v411
        %v427 = vshrl.u32 1326507024, %v412
        %v428 = vor.u32 %v426, %v427
        %vm429 = vcmp.lt.s32.totalorder %v410, 1
        %vm430 = vcmp.lt.s32.totalorder %v410, 2
        %vm431 = vcmp.lt.s32.totalorder %v410, 3
        %vm432 = vcmp.lt.s32.totalorder %v410, 4
        %v433 = vsel %vm429, %v413, %v416
        %v434 = vsel %vm432, %v422, 2102212464
        %v435 = vsel %vm431, %v419, %v434
        %v436 = vsel %vm430, %v433, %v435
        %v437 = vsel %vm429, %v416, %v419
        %v438 = vsel %vm432, %v425, 920167782
        %v439 = vsel %vm431, %v422, %v438
        %v440 = vsel %vm430, %v437, %v439
        %v441 = vsel %vm429, %v419, %v422
        %v442 = vsel %vm432, %v428, 1326507024
        %v443 = vsel %vm431, %v425, %v442
        %v444 = vsel %vm430, %v441, %v443
        %v445 = vshll.u32 %v405, 8
        %v446 = vmul.u32.u64.compose %v445, %v444
        %v447 = vextract.low.u32 %v446
        %v448 = vextract.high.u32 %v446
        %v449 = vmul.u32.u64.compose %v445, %v440
        %v450 = vextract.low.u32 %v449
        %v451 = vextract.high.u32 %v449
        %v452 = vmul.u32 %v445, %v436
        %v453 = vadd.s32 %v448, %v450
        %vm454 = vc.u32 %v448, %v450
        %v455 = vadd.s32 %v451, 1
        %v456 = vsel %vm454, %v455, %v451
        %v457 = vadd.s32 %v452, %v456
        %v458 = vadd.s32 %v457, 536870912
        %v459 = vshrl.u32 %v458, 30
        %v460 = vshll.u32 %v459, 30
        %v461 = vsub.s32 %v457, %v460
        %vm462 = vcmp.lt.s32.totalorder %v461, 0
        %v463 = vsub.s32 0, %v461
        %v464 = vsel %vm462, %v463, %v461
        %v465 = vclz %v464
        %v466 = vsub.s32 %v465, 2
        %vm467 = vcmp.gt.s32.totalorder 0, %v466
        %v468 = vsel %vm467, 0, %v466
        %v469 = vsub.s32 32, %v468
        %v470 = vshll.u32 %v461, %v468
        %v471 = vshrl.u32 %v453, %v469
        %v472 = vor.u32 %v470, %v471
        %v473 = vsub.s32 4294967266, %v468
        %v474 = vadd.s32 %v473, 127
        %v475 = vshll.u32 %v474, 23
        %v476 = vor.u32 4788187, %v475
        %v477 = vand.u32 2147483647, %v476
        %v479 = vcvt.s32.f32 %v472
        %v480 = vmul.f32 %v479, %v477
        %v481 = vxor.u32 %v480, 2147483648
        %v482 = vsel %vm399, %v481, %v480
        %v483 = vsub.s32 4, %v459
        %v484 = vsel %vm399, %v483, %v459
        %v485 = vsel %vm398, %v319, %v482
        %v486 = vsel %vm398, 0, %v484
        %v487 = vcosq.f32.pop %v485
        %v488 = vsinq.f32.pop %v485
        %vm489 = vweird.f32 %v319
        %v490 = vadd.s32 %v486, 3
        %v491 = vand.u32 %v490, 3
        %vm492 = vcmp.lt.s32.totalorder %v491, 2
        %vm493 = vcmp.eq.s32.totalorder %v491, 0
        %v494 = vxor.u32 %v488, 2147483648
        %v495 = vsel %vm493, %v487, %v494
        %vm496 = vcmp.eq.s32.totalorder %v491, 2
        %v497 = vxor.u32 %v487, 2147483648
        %v498 = vsel %vm496, %v497, %v488
        %v499 = vsel %vm492, %v495, %v498
        %v500 = vsel %vm489, nan, %v499
        %v501 = vand.u32 2147483647, %v324
        %vm502 = vcmp.le.f32.partialorder %v501, 0.7853982
        %vm503 = vcmp.lt.s32.totalorder %v324, 0
        %v504 = vand.u32 %v324, 2139095040
        %v505 = vshrl.u32 %v504, 23
        %v506 = vsub.s32 %v505, 127
        %v507 = vand.u32 2147483647, %v324
        %v508 = vand.u32 %v507, 8388607
        %v509 = vor.u32 %v508, 8388608
        %v510 = vsub.s32 0, %v509
        %v511 = vadd.s32 %v506, 1
        %vm512 = vcmp.gt.s32.totalorder %v511, 0
        %v513 = vsel %vm512, %v511, 0
        %v514 = vshrl.u32 %v513, 5
        %v515 = vand.u32 %v513, 31
        %v516 = vsub.s32 32, %v515
        %v517 = vshrl.u32 683565275, %v516
        %v518 = vshll.u32 683565275, %v515
        %v519 = vshrl.u32 2475754826, %v516
        %v520 = vor.u32 %v518, %v519
        %v521 = vshll.u32 2475754826, %v515
        %v522 = vshrl.u32 2131351028, %v516
        %v523 = vor.u32 %v521, %v522
        %v524 = vshll.u32 2131351028, %v515
        %v525 = vshrl.u32 2102212464, %v516
        %v526 = vor.u32 %v524, %v525
        %v527 = vshll.u32 2102212464, %v515
        %v528 = vshrl.u32 920167782, %v516
        %v529 = vor.u32 %v527, %v528
        %v530 = vshll.u32 920167782, %v515
        %v531 = vshrl.u32 1326507024, %v516
        %v532 = vor.u32 %v530, %v531
        %vm533 = vcmp.lt.s32.totalorder %v514, 1
        %vm534 = vcmp.lt.s32.totalorder %v514, 2
        %vm535 = vcmp.lt.s32.totalorder %v514, 3
        %vm536 = vcmp.lt.s32.totalorder %v514, 4
        %v537 = vsel %vm533, %v517, %v520
        %v538 = vsel %vm536, %v526, 2102212464
        %v539 = vsel %vm535, %v523, %v538
        %v540 = vsel %vm534, %v537, %v539
        %v541 = vsel %vm533, %v520, %v523
        %v542 = vsel %vm536, %v529, 920167782
        %v543 = vsel %vm535, %v526, %v542
        %v544 = vsel %vm534, %v541, %v543
        %v545 = vsel %vm533, %v523, %v526
        %v546 = vsel %vm536, %v532, 1326507024
        %v547 = vsel %vm535, %v529, %v546
        %v548 = vsel %vm534, %v545, %v547
        %v549 = vshll.u32 %v509, 8
        %v550 = vmul.u32.u64.compose %v549, %v548
        %v551 = vextract.low.u32 %v550
        %v552 = vextract.high.u32 %v550
        %v553 = vmul.u32.u64.compose %v549, %v544
        %v554 = vextract.low.u32 %v553
        %v555 = vextract.high.u32 %v553
        %v556 = vmul.u32 %v549, %v540
        %v557 = vadd.s32 %v552, %v554
        %vm558 = vc.u32 %v552, %v554
        %v559 = vadd.s32 %v555, 1
        %v560 = vsel %vm558, %v559, %v555
        %v561 = vadd.s32 %v556, %v560
        %v562 = vadd.s32 %v561, 536870912
        %v563 = vshrl.u32 %v562, 30
        %v564 = vshll.u32 %v563, 30
        %v565 = vsub.s32 %v561, %v564
        %vm566 = vcmp.lt.s32.totalorder %v565, 0
        %v567 = vsub.s32 0, %v565
        %v568 = vsel %vm566, %v567, %v565
        %v569 = vclz %v568
        %v570 = vsub.s32 %v569, 2
        %vm571 = vcmp.gt.s32.totalorder 0, %v570
        %v572 = vsel %vm571, 0, %v570
        %v573 = vsub.s32 32, %v572
        %v574 = vshll.u32 %v565, %v572
        %v575 = vshrl.u32 %v557, %v573
        %v576 = vor.u32 %v574, %v575
        %v577 = vsub.s32 4294967266, %v572
        %v578 = vadd.s32 %v577, 127
        %v579 = vshll.u32 %v578, 23
        %v580 = vor.u32 4788187, %v579
        %v581 = vand.u32 2147483647, %v580
        %v583 = vcvt.s32.f32 %v576
        %v584 = vmul.f32 %v583, %v581
        %v585 = vxor.u32 %v584, 2147483648
        %v586 = vsel %vm503, %v585, %v584
        %v587 = vsub.s32 4, %v563
        %v588 = vsel %vm503, %v587, %v563
        %v589 = vsel %vm502, %v324, %v586
        %v590 = vsel %vm502, 0, %v588
        %v591 = vcosq.f32.pop %v589
        %v592 = vsinq.f32.pop %v589
        %vm593 = vweird.f32 %v324
        %v594 = vadd.s32 %v590, 3
        %v595 = vand.u32 %v594, 3
        %vm596 = vcmp.lt.s32.totalorder %v595, 2
        %vm597 = vcmp.eq.s32.totalorder %v595, 0
        %v598 = vxor.u32 %v592, 2147483648
        %v599 = vsel %vm597, %v591, %v598
        %vm600 = vcmp.eq.s32.totalorder %v595, 2
        %v601 = vxor.u32 %v591, 2147483648
        %v602 = vsel %vm600, %v601, %v592
        %v603 = vsel %vm596, %v599, %v602
        %v604 = vsel %vm593, nan, %v603
        %v605 = vand.u32 2147483647, %v329
        %vm606 = vcmp.le.f32.partialorder %v605, 0.7853982
        %vm607 = vcmp.lt.s32.totalorder %v329, 0
        %v608 = vand.u32 %v329, 2139095040
        %v609 = vshrl.u32 %v608, 23
        %v610 = vsub.s32 %v609, 127
        %v611 = vand.u32 2147483647, %v329
        %v612 = vand.u32 %v611, 8388607
        %v613 = vor.u32 %v612, 8388608
        %v614 = vsub.s32 0, %v613
        %v615 = vadd.s32 %v610, 1
        %vm616 = vcmp.gt.s32.totalorder %v615, 0
        %v617 = vsel %vm616, %v615, 0
        %v618 = vshrl.u32 %v617, 5
        %v619 = vand.u32 %v617, 31
        %v620 = vsub.s32 32, %v619
        %v621 = vshrl.u32 683565275, %v620
        %v622 = vshll.u32 683565275, %v619
        %v623 = vshrl.u32 2475754826, %v620
        %v624 = vor.u32 %v622, %v623
        %v625 = vshll.u32 2475754826, %v619
        %v626 = vshrl.u32 2131351028, %v620
        %v627 = vor.u32 %v625, %v626
        %v628 = vshll.u32 2131351028, %v619
        %v629 = vshrl.u32 2102212464, %v620
        %v630 = vor.u32 %v628, %v629
        %v631 = vshll.u32 2102212464, %v619
        %v632 = vshrl.u32 920167782, %v620
        %v633 = vor.u32 %v631, %v632
        %v634 = vshll.u32 920167782, %v619
        %v635 = vshrl.u32 1326507024, %v620
        %v636 = vor.u32 %v634, %v635
        %vm637 = vcmp.lt.s32.totalorder %v618, 1
        %vm638 = vcmp.lt.s32.totalorder %v618, 2
        %vm639 = vcmp.lt.s32.totalorder %v618, 3
        %vm640 = vcmp.lt.s32.totalorder %v618, 4
        %v641 = vsel %vm637, %v621, %v624
        %v642 = vsel %vm640, %v630, 2102212464
        %v643 = vsel %vm639, %v627, %v642
        %v644 = vsel %vm638, %v641, %v643
        %v645 = vsel %vm637, %v624, %v627
        %v646 = vsel %vm640, %v633, 920167782
        %v647 = vsel %vm639, %v630, %v646
        %v648 = vsel %vm638, %v645, %v647
        %v649 = vsel %vm637, %v627, %v630
        %v650 = vsel %vm640, %v636, 1326507024
        %v651 = vsel %vm639, %v633, %v650
        %v652 = vsel %vm638, %v649, %v651
        %v653 = vshll.u32 %v613, 8
        %v654 = vmul.u32.u64.compose %v653, %v652
        %v655 = vextract.low.u32 %v654
        %v656 = vextract.high.u32 %v654
        %v657 = vmul.u32.u64.compose %v653, %v648
        %v658 = vextract.low.u32 %v657
        %v659 = vextract.high.u32 %v657
        %v660 = vmul.u32 %v653, %v644
        %v661 = vadd.s32 %v656, %v658
        %vm662 = vc.u32 %v656, %v658
        %v663 = vadd.s32 %v659, 1
        %v664 = vsel %vm662, %v663, %v659
        %v665 = vadd.s32 %v660, %v664
        %v666 = vadd.s32 %v665, 536870912
        %v667 = vshrl.u32 %v666, 30
        %v668 = vshll.u32 %v667, 30
        %v669 = vsub.s32 %v665, %v668
        %vm670 = vcmp.lt.s32.totalorder %v669, 0
        %v671 = vsub.s32 0, %v669
        %v672 = vsel %vm670, %v671, %v669
        %v673 = vclz %v672
        %v674 = vsub.s32 %v673, 2
        %vm675 = vcmp.gt.s32.totalorder 0, %v674
        %v676 = vsel %vm675, 0, %v674
        %v677 = vsub.s32 32, %v676
        %v678 = vshll.u32 %v669, %v676
        %v679 = vshrl.u32 %v661, %v677
        %v680 = vor.u32 %v678, %v679
        %v681 = vsub.s32 4294967266, %v676
        %v682 = vadd.s32 %v681, 127
        %v683 = vshll.u32 %v682, 23
        %v684 = vor.u32 4788187, %v683
        %v685 = vand.u32 2147483647, %v684
        %v687 = vcvt.s32.f32 %v680
        %v688 = vmul.f32 %v687, %v685
        %v689 = vxor.u32 %v688, 2147483648
        %v690 = vsel %vm607, %v689, %v688
        %v691 = vsub.s32 4, %v667
        %v692 = vsel %vm607, %v691, %v667
        %v693 = vsel %vm606, %v329, %v690
        %v694 = vsel %vm606, 0, %v692
        %v695 = vcosq.f32.pop %v693
        %v696 = vsinq.f32.pop %v693
        %vm697 = vweird.f32 %v329
        %v698 = vadd.s32 %v694, 3
        %v699 = vand.u32 %v698, 3
        %vm700 = vcmp.lt.s32.totalorder %v699, 2
        %vm701 = vcmp.eq.s32.totalorder %v699, 0
        %v702 = vxor.u32 %v696, 2147483648
        %v703 = vsel %vm701, %v695, %v702
        %vm704 = vcmp.eq.s32.totalorder %v699, 2
        %v705 = vxor.u32 %v695, 2147483648
        %v706 = vsel %vm704, %v705, %v696
        %v707 = vsel %vm700, %v703, %v706
        %v708 = vsel %vm697, nan, %v707
        %v709 = vand.u32 2147483647, %v334
        %vm710 = vcmp.le.f32.partialorder %v709, 0.7853982
        %vm711 = vcmp.lt.s32.totalorder %v334, 0
        %v712 = vand.u32 %v334, 2139095040
        %v713 = vshrl.u32 %v712, 23
        %v714 = vsub.s32 %v713, 127
        %v715 = vand.u32 2147483647, %v334
        %v716 = vand.u32 %v715, 8388607
        %v717 = vor.u32 %v716, 8388608
        %v718 = vsub.s32 0, %v717
        %v719 = vadd.s32 %v714, 1
        %vm720 = vcmp.gt.s32.totalorder %v719, 0
        %v721 = vsel %vm720, %v719, 0
        %v722 = vshrl.u32 %v721, 5
        %v723 = vand.u32 %v721, 31
        %v724 = vsub.s32 32, %v723
        %v725 = vshrl.u32 683565275, %v724
        %v726 = vshll.u32 683565275, %v723
        %v727 = vshrl.u32 2475754826, %v724
        %v728 = vor.u32 %v726, %v727
        %v729 = vshll.u32 2475754826, %v723
        %v730 = vshrl.u32 2131351028, %v724
        %v731 = vor.u32 %v729, %v730
        %v732 = vshll.u32 2131351028, %v723
        %v733 = vshrl.u32 2102212464, %v724
        %v734 = vor.u32 %v732, %v733
        %v735 = vshll.u32 2102212464, %v723
        %v736 = vshrl.u32 920167782, %v724
        %v737 = vor.u32 %v735, %v736
        %v738 = vshll.u32 920167782, %v723
        %v739 = vshrl.u32 1326507024, %v724
        %v740 = vor.u32 %v738, %v739
        %vm741 = vcmp.lt.s32.totalorder %v722, 1
        %vm742 = vcmp.lt.s32.totalorder %v722, 2
        %vm743 = vcmp.lt.s32.totalorder %v722, 3
        %vm744 = vcmp.lt.s32.totalorder %v722, 4
        %v745 = vsel %vm741, %v725, %v728
        %v746 = vsel %vm744, %v734, 2102212464
        %v747 = vsel %vm743, %v731, %v746
        %v748 = vsel %vm742, %v745, %v747
        %v749 = vsel %vm741, %v728, %v731
        %v750 = vsel %vm744, %v737, 920167782
        %v751 = vsel %vm743, %v734, %v750
        %v752 = vsel %vm742, %v749, %v751
        %v753 = vsel %vm741, %v731, %v734
        %v754 = vsel %vm744, %v740, 1326507024
        %v755 = vsel %vm743, %v737, %v754
        %v756 = vsel %vm742, %v753, %v755
        %v757 = vshll.u32 %v717, 8
        %v758 = vmul.u32.u64.compose %v757, %v756
        %v759 = vextract.low.u32 %v758
        %v760 = vextract.high.u32 %v758
        %v761 = vmul.u32.u64.compose %v757, %v752
        %v762 = vextract.low.u32 %v761
        %v763 = vextract.high.u32 %v761
        %v764 = vmul.u32 %v757, %v748
        %v765 = vadd.s32 %v760, %v762
        %vm766 = vc.u32 %v760, %v762
        %v767 = vadd.s32 %v763, 1
        %v768 = vsel %vm766, %v767, %v763
        %v769 = vadd.s32 %v764, %v768
        %v770 = vadd.s32 %v769, 536870912
        %v771 = vshrl.u32 %v770, 30
        %v772 = vshll.u32 %v771, 30
        %v773 = vsub.s32 %v769, %v772
        %vm774 = vcmp.lt.s32.totalorder %v773, 0
        %v775 = vsub.s32 0, %v773
        %v776 = vsel %vm774, %v775, %v773
        %v777 = vclz %v776
        %v778 = vsub.s32 %v777, 2
        %vm779 = vcmp.gt.s32.totalorder 0, %v778
        %v780 = vsel %vm779, 0, %v778
        %v781 = vsub.s32 32, %v780
        %v782 = vshll.u32 %v773, %v780
        %v783 = vshrl.u32 %v765, %v781
        %v784 = vor.u32 %v782, %v783
        %v785 = vsub.s32 4294967266, %v780
        %v786 = vadd.s32 %v785, 127
        %v787 = vshll.u32 %v786, 23
        %v788 = vor.u32 4788187, %v787
        %v789 = vand.u32 2147483647, %v788
        %v791 = vcvt.s32.f32 %v784
        %v792 = vmul.f32 %v791, %v789
        %v793 = vxor.u32 %v792, 2147483648
        %v794 = vsel %vm711, %v793, %v792
        %v795 = vsub.s32 4, %v771
        %v796 = vsel %vm711, %v795, %v771
        %v797 = vsel %vm710, %v334, %v794
        %v798 = vsel %vm710, 0, %v796
        %v799 = vcosq.f32.pop %v797
        %v800 = vsinq.f32.pop %v797
        %vm801 = vweird.f32 %v334
        %v802 = vadd.s32 %v798, 3
        %v803 = vand.u32 %v802, 3
        %vm804 = vcmp.lt.s32.totalorder %v803, 2
        %vm805 = vcmp.eq.s32.totalorder %v803, 0
        %v806 = vxor.u32 %v800, 2147483648
        %v807 = vsel %vm805, %v799, %v806
        %vm808 = vcmp.eq.s32.totalorder %v803, 2
        %v809 = vxor.u32 %v799, 2147483648
        %v810 = vsel %vm808, %v809, %v800
        %v811 = vsel %vm804, %v807, %v810
        %v812 = vsel %vm801, nan, %v811
        %v813 = vand.u32 2147483647, %v339
        %vm814 = vcmp.le.f32.partialorder %v813, 0.7853982
        %vm815 = vcmp.lt.s32.totalorder %v339, 0
        %v816 = vand.u32 %v339, 2139095040
        %v817 = vshrl.u32 %v816, 23
        %v818 = vsub.s32 %v817, 127
        %v819 = vand.u32 2147483647, %v339
        %v820 = vand.u32 %v819, 8388607
        %v821 = vor.u32 %v820, 8388608
        %v822 = vsub.s32 0, %v821
        %v823 = vadd.s32 %v818, 1
        %vm824 = vcmp.gt.s32.totalorder %v823, 0
        %v825 = vsel %vm824, %v823, 0
        %v826 = vshrl.u32 %v825, 5
        %v827 = vand.u32 %v825, 31
        %v828 = vsub.s32 32, %v827
        %v829 = vshrl.u32 683565275, %v828
        %v830 = vshll.u32 683565275, %v827
        %v831 = vshrl.u32 2475754826, %v828
        %v832 = vor.u32 %v830, %v831
        %v833 = vshll.u32 2475754826, %v827
        %v834 = vshrl.u32 2131351028, %v828
        %v835 = vor.u32 %v833, %v834
        %v836 = vshll.u32 2131351028, %v827
        %v837 = vshrl.u32 2102212464, %v828
        %v838 = vor.u32 %v836, %v837
        %v839 = vshll.u32 2102212464, %v827
        %v840 = vshrl.u32 920167782, %v828
        %v841 = vor.u32 %v839, %v840
        %v842 = vshll.u32 920167782, %v827
        %v843 = vshrl.u32 1326507024, %v828
        %v844 = vor.u32 %v842, %v843
        %vm845 = vcmp.lt.s32.totalorder %v826, 1
        %vm846 = vcmp.lt.s32.totalorder %v826, 2
        %vm847 = vcmp.lt.s32.totalorder %v826, 3
        %vm848 = vcmp.lt.s32.totalorder %v826, 4
        %v849 = vsel %vm845, %v829, %v832
        %v850 = vsel %vm848, %v838, 2102212464
        %v851 = vsel %vm847, %v835, %v850
        %v852 = vsel %vm846, %v849, %v851
        %v853 = vsel %vm845, %v832, %v835
        %v854 = vsel %vm848, %v841, 920167782
        %v855 = vsel %vm847, %v838, %v854
        %v856 = vsel %vm846, %v853, %v855
        %v857 = vsel %vm845, %v835, %v838
        %v858 = vsel %vm848, %v844, 1326507024
        %v859 = vsel %vm847, %v841, %v858
        %v860 = vsel %vm846, %v857, %v859
        %v861 = vshll.u32 %v821, 8
        %v862 = vmul.u32.u64.compose %v861, %v860
        %v863 = vextract.low.u32 %v862
        %v864 = vextract.high.u32 %v862
        %v865 = vmul.u32.u64.compose %v861, %v856
        %v866 = vextract.low.u32 %v865
        %v867 = vextract.high.u32 %v865
        %v868 = vmul.u32 %v861, %v852
        %v869 = vadd.s32 %v864, %v866
        %vm870 = vc.u32 %v864, %v866
        %v871 = vadd.s32 %v867, 1
        %v872 = vsel %vm870, %v871, %v867
        %v873 = vadd.s32 %v868, %v872
        %v874 = vadd.s32 %v873, 536870912
        %v875 = vshrl.u32 %v874, 30
        %v876 = vshll.u32 %v875, 30
        %v877 = vsub.s32 %v873, %v876
        %vm878 = vcmp.lt.s32.totalorder %v877, 0
        %v879 = vsub.s32 0, %v877
        %v880 = vsel %vm878, %v879, %v877
        %v881 = vclz %v880
        %v882 = vsub.s32 %v881, 2
        %vm883 = vcmp.gt.s32.totalorder 0, %v882
        %v884 = vsel %vm883, 0, %v882
        %v885 = vsub.s32 32, %v884
        %v886 = vshll.u32 %v877, %v884
        %v887 = vshrl.u32 %v869, %v885
        %v888 = vor.u32 %v886, %v887
        %v889 = vsub.s32 4294967266, %v884
        %v890 = vadd.s32 %v889, 127
        %v891 = vshll.u32 %v890, 23
        %v892 = vor.u32 4788187, %v891
        %v893 = vand.u32 2147483647, %v892
        %v895 = vcvt.s32.f32 %v888
        %v896 = vmul.f32 %v895, %v893
        %v897 = vxor.u32 %v896, 2147483648
        %v898 = vsel %vm815, %v897, %v896
        %v899 = vsub.s32 4, %v875
        %v900 = vsel %vm815, %v899, %v875
        %v901 = vsel %vm814, %v339, %v898
        %v902 = vsel %vm814, 0, %v900
        %v903 = vcosq.f32.pop %v901
        %v904 = vsinq.f32.pop %v901
        %vm905 = vweird.f32 %v339
        %v906 = vadd.s32 %v902, 3
        %v907 = vand.u32 %v906, 3
        %vm908 = vcmp.lt.s32.totalorder %v907, 2
        %vm909 = vcmp.eq.s32.totalorder %v907, 0
        %v910 = vxor.u32 %v904, 2147483648
        %v911 = vsel %vm909, %v903, %v910
        %vm912 = vcmp.eq.s32.totalorder %v907, 2
        %v913 = vxor.u32 %v903, 2147483648
        %v914 = vsel %vm912, %v913, %v904
        %v915 = vsel %vm908, %v911, %v914
        %v916 = vsel %vm905, nan, %v915
        %v917 = vand.u32 2147483647, %v344
        %vm918 = vcmp.le.f32.partialorder %v917, 0.7853982
        %vm919 = vcmp.lt.s32.totalorder %v344, 0
        %v920 = vand.u32 %v344, 2139095040
        %v921 = vshrl.u32 %v920, 23
        %v922 = vsub.s32 %v921, 127
        %v923 = vand.u32 2147483647, %v344
        %v924 = vand.u32 %v923, 8388607
        %v925 = vor.u32 %v924, 8388608
        %v926 = vsub.s32 0, %v925
        %v927 = vadd.s32 %v922, 1
        %vm928 = vcmp.gt.s32.totalorder %v927, 0
        %v929 = vsel %vm928, %v927, 0
        %v930 = vshrl.u32 %v929, 5
        %v931 = vand.u32 %v929, 31
        %v932 = vsub.s32 32, %v931
        %v933 = vshrl.u32 683565275, %v932
        %v934 = vshll.u32 683565275, %v931
        %v935 = vshrl.u32 2475754826, %v932
        %v936 = vor.u32 %v934, %v935
        %v937 = vshll.u32 2475754826, %v931
        %v938 = vshrl.u32 2131351028, %v932
        %v939 = vor.u32 %v937, %v938
        %v940 = vshll.u32 2131351028, %v931
        %v941 = vshrl.u32 2102212464, %v932
        %v942 = vor.u32 %v940, %v941
        %v943 = vshll.u32 2102212464, %v931
        %v944 = vshrl.u32 920167782, %v932
        %v945 = vor.u32 %v943, %v944
        %v946 = vshll.u32 920167782, %v931
        %v947 = vshrl.u32 1326507024, %v932
        %v948 = vor.u32 %v946, %v947
        %vm949 = vcmp.lt.s32.totalorder %v930, 1
        %vm950 = vcmp.lt.s32.totalorder %v930, 2
        %vm951 = vcmp.lt.s32.totalorder %v930, 3
        %vm952 = vcmp.lt.s32.totalorder %v930, 4
        %v953 = vsel %vm949, %v933, %v936
        %v954 = vsel %vm952, %v942, 2102212464
        %v955 = vsel %vm951, %v939, %v954
        %v956 = vsel %vm950, %v953, %v955
        %v957 = vsel %vm949, %v936, %v939
        %v958 = vsel %vm952, %v945, 920167782
        %v959 = vsel %vm951, %v942, %v958
        %v960 = vsel %vm950, %v957, %v959
        %v961 = vsel %vm949, %v939, %v942
        %v962 = vsel %vm952, %v948, 1326507024
        %v963 = vsel %vm951, %v945, %v962
        %v964 = vsel %vm950, %v961, %v963
        %v965 = vshll.u32 %v925, 8
        %v966 = vmul.u32.u64.compose %v965, %v964
        %v967 = vextract.low.u32 %v966
        %v968 = vextract.high.u32 %v966
        %v969 = vmul.u32.u64.compose %v965, %v960
        %v970 = vextract.low.u32 %v969
        %v971 = vextract.high.u32 %v969
        %v972 = vmul.u32 %v965, %v956
        %v973 = vadd.s32 %v968, %v970
        %vm974 = vc.u32 %v968, %v970
        %v975 = vadd.s32 %v971, 1
        %v976 = vsel %vm974, %v975, %v971
        %v977 = vadd.s32 %v972, %v976
        %v978 = vadd.s32 %v977, 536870912
        %v979 = vshrl.u32 %v978, 30
        %v980 = vshll.u32 %v979, 30
        %v981 = vsub.s32 %v977, %v980
        %vm982 = vcmp.lt.s32.totalorder %v981, 0
        %v983 = vsub.s32 0, %v981
        %v984 = vsel %vm982, %v983, %v981
        %v985 = vclz %v984
        %v986 = vsub.s32 %v985, 2
        %vm987 = vcmp.gt.s32.totalorder 0, %v986
        %v988 = vsel %vm987, 0, %v986
        %v989 = vsub.s32 32, %v988
        %v990 = vshll.u32 %v981, %v988
        %v991 = vshrl.u32 %v973, %v989
        %v992 = vor.u32 %v990, %v991
        %v993 = vsub.s32 4294967266, %v988
        %v994 = vadd.s32 %v993, 127
        %v995 = vshll.u32 %v994, 23
        %v996 = vor.u32 4788187, %v995
        %v997 = vand.u32 2147483647, %v996
        %v999 = vcvt.s32.f32 %v992
        %v1000 = vmul.f32 %v999, %v997
        %v1001 = vxor.u32 %v1000, 2147483648
        %v1002 = vsel %vm919, %v1001, %v1000
        %v1003 = vsub.s32 4, %v979
        %v1004 = vsel %vm919, %v1003, %v979
        %v1005 = vsel %vm918, %v344, %v1002
        %v1006 = vsel %vm918, 0, %v1004
        %v1007 = vcosq.f32.pop %v1005
        %v1008 = vsinq.f32.pop %v1005
        %vm1009 = vweird.f32 %v344
        %v1010 = vadd.s32 %v1006, 3
        %v1011 = vand.u32 %v1010, 3
        %vm1012 = vcmp.lt.s32.totalorder %v1011, 2
        %vm1013 = vcmp.eq.s32.totalorder %v1011, 0
        %v1014 = vxor.u32 %v1008, 2147483648
        %v1015 = vsel %vm1013, %v1007, %v1014
        %vm1016 = vcmp.eq.s32.totalorder %v1011, 2
        %v1017 = vxor.u32 %v1007, 2147483648
        %v1018 = vsel %vm1016, %v1017, %v1008
        %v1019 = vsel %vm1012, %v1015, %v1018
        %v1020 = vsel %vm1009, nan, %v1019
        %v1021 = vand.u32 2147483647, %v349
        %vm1022 = vcmp.le.f32.partialorder %v1021, 0.7853982
        %vm1023 = vcmp.lt.s32.totalorder %v349, 0
        %v1024 = vand.u32 %v349, 2139095040
        %v1025 = vshrl.u32 %v1024, 23
        %v1026 = vsub.s32 %v1025, 127
        %v1027 = vand.u32 2147483647, %v349
        %v1028 = vand.u32 %v1027, 8388607
        %v1029 = vor.u32 %v1028, 8388608
        %v1030 = vsub.s32 0, %v1029
        %v1031 = vadd.s32 %v1026, 1
        %vm1032 = vcmp.gt.s32.totalorder %v1031, 0
        %v1033 = vsel %vm1032, %v1031, 0
        %v1034 = vshrl.u32 %v1033, 5
        %v1035 = vand.u32 %v1033, 31
        %v1036 = vsub.s32 32, %v1035
        %v1037 = vshrl.u32 683565275, %v1036
        %v1038 = vshll.u32 683565275, %v1035
        %v1039 = vshrl.u32 2475754826, %v1036
        %v1040 = vor.u32 %v1038, %v1039
        %v1041 = vshll.u32 2475754826, %v1035
        %v1042 = vshrl.u32 2131351028, %v1036
        %v1043 = vor.u32 %v1041, %v1042
        %v1044 = vshll.u32 2131351028, %v1035
        %v1045 = vshrl.u32 2102212464, %v1036
        %v1046 = vor.u32 %v1044, %v1045
        %v1047 = vshll.u32 2102212464, %v1035
        %v1048 = vshrl.u32 920167782, %v1036
        %v1049 = vor.u32 %v1047, %v1048
        %v1050 = vshll.u32 920167782, %v1035
        %v1051 = vshrl.u32 1326507024, %v1036
        %v1052 = vor.u32 %v1050, %v1051
        %vm1053 = vcmp.lt.s32.totalorder %v1034, 1
        %vm1054 = vcmp.lt.s32.totalorder %v1034, 2
        %vm1055 = vcmp.lt.s32.totalorder %v1034, 3
        %vm1056 = vcmp.lt.s32.totalorder %v1034, 4
        %v1057 = vsel %vm1053, %v1037, %v1040
        %v1058 = vsel %vm1056, %v1046, 2102212464
        %v1059 = vsel %vm1055, %v1043, %v1058
        %v1060 = vsel %vm1054, %v1057, %v1059
        %v1061 = vsel %vm1053, %v1040, %v1043
        %v1062 = vsel %vm1056, %v1049, 920167782
        %v1063 = vsel %vm1055, %v1046, %v1062
        %v1064 = vsel %vm1054, %v1061, %v1063
        %v1065 = vsel %vm1053, %v1043, %v1046
        %v1066 = vsel %vm1056, %v1052, 1326507024
        %v1067 = vsel %vm1055, %v1049, %v1066
        %v1068 = vsel %vm1054, %v1065, %v1067
        %v1069 = vshll.u32 %v1029, 8
        %v1070 = vmul.u32.u64.compose %v1069, %v1068
        %v1071 = vextract.low.u32 %v1070
        %v1072 = vextract.high.u32 %v1070
        %v1073 = vmul.u32.u64.compose %v1069, %v1064
        %v1074 = vextract.low.u32 %v1073
        %v1075 = vextract.high.u32 %v1073
        %v1076 = vmul.u32 %v1069, %v1060
        %v1077 = vadd.s32 %v1072, %v1074
        %vm1078 = vc.u32 %v1072, %v1074
        %v1079 = vadd.s32 %v1075, 1
        %v1080 = vsel %vm1078, %v1079, %v1075
        %v1081 = vadd.s32 %v1076, %v1080
        %v1082 = vadd.s32 %v1081, 536870912
        %v1083 = vshrl.u32 %v1082, 30
        %v1084 = vshll.u32 %v1083, 30
        %v1085 = vsub.s32 %v1081, %v1084
        %vm1086 = vcmp.lt.s32.totalorder %v1085, 0
        %v1087 = vsub.s32 0, %v1085
        %v1088 = vsel %vm1086, %v1087, %v1085
        %v1089 = vclz %v1088
        %v1090 = vsub.s32 %v1089, 2
        %vm1091 = vcmp.gt.s32.totalorder 0, %v1090
        %v1092 = vsel %vm1091, 0, %v1090
        %v1093 = vsub.s32 32, %v1092
        %v1094 = vshll.u32 %v1085, %v1092
        %v1095 = vshrl.u32 %v1077, %v1093
        %v1096 = vor.u32 %v1094, %v1095
        %v1097 = vsub.s32 4294967266, %v1092
        %v1098 = vadd.s32 %v1097, 127
        %v1099 = vshll.u32 %v1098, 23
        %v1100 = vor.u32 4788187, %v1099
        %v1101 = vand.u32 2147483647, %v1100
        %v1103 = vcvt.s32.f32 %v1096
        %v1104 = vmul.f32 %v1103, %v1101
        %v1105 = vxor.u32 %v1104, 2147483648
        %v1106 = vsel %vm1023, %v1105, %v1104
        %v1107 = vsub.s32 4, %v1083
        %v1108 = vsel %vm1023, %v1107, %v1083
        %v1109 = vsel %vm1022, %v349, %v1106
        %v1110 = vsel %vm1022, 0, %v1108
        %v1111 = vcosq.f32.pop %v1109
        %v1112 = vsinq.f32.pop %v1109
        %vm1113 = vweird.f32 %v349
        %v1114 = vadd.s32 %v1110, 3
        %v1115 = vand.u32 %v1114, 3
        %vm1116 = vcmp.lt.s32.totalorder %v1115, 2
        %vm1117 = vcmp.eq.s32.totalorder %v1115, 0
        %v1118 = vxor.u32 %v1112, 2147483648
        %v1119 = vsel %vm1117, %v1111, %v1118
        %vm1120 = vcmp.eq.s32.totalorder %v1115, 2
        %v1121 = vxor.u32 %v1111, 2147483648
        %v1122 = vsel %vm1120, %v1121, %v1112
        %v1123 = vsel %vm1116, %v1119, %v1122
        %v1124 = vsel %vm1113, nan, %v1123
        %v1125 = vand.u32 2147483647, %v354
        %vm1126 = vcmp.le.f32.partialorder %v1125, 0.7853982
        %vm1127 = vcmp.lt.s32.totalorder %v354, 0
        %v1128 = vand.u32 %v354, 2139095040
        %v1129 = vshrl.u32 %v1128, 23
        %v1130 = vsub.s32 %v1129, 127
        %v1131 = vand.u32 2147483647, %v354
        %v1132 = vand.u32 %v1131, 8388607
        %v1133 = vor.u32 %v1132, 8388608
        %v1134 = vsub.s32 0, %v1133
        %v1135 = vadd.s32 %v1130, 1
        %vm1136 = vcmp.gt.s32.totalorder %v1135, 0
        %v1137 = vsel %vm1136, %v1135, 0
        %v1138 = vshrl.u32 %v1137, 5
        %v1139 = vand.u32 %v1137, 31
        %v1140 = vsub.s32 32, %v1139
        %v1141 = vshrl.u32 683565275, %v1140
        %v1142 = vshll.u32 683565275, %v1139
        %v1143 = vshrl.u32 2475754826, %v1140
        %v1144 = vor.u32 %v1142, %v1143
        %v1145 = vshll.u32 2475754826, %v1139
        %v1146 = vshrl.u32 2131351028, %v1140
        %v1147 = vor.u32 %v1145, %v1146
        %v1148 = vshll.u32 2131351028, %v1139
        %v1149 = vshrl.u32 2102212464, %v1140
        %v1150 = vor.u32 %v1148, %v1149
        %v1151 = vshll.u32 2102212464, %v1139
        %v1152 = vshrl.u32 920167782, %v1140
        %v1153 = vor.u32 %v1151, %v1152
        %v1154 = vshll.u32 920167782, %v1139
        %v1155 = vshrl.u32 1326507024, %v1140
        %v1156 = vor.u32 %v1154, %v1155
        %vm1157 = vcmp.lt.s32.totalorder %v1138, 1
        %vm1158 = vcmp.lt.s32.totalorder %v1138, 2
        %vm1159 = vcmp.lt.s32.totalorder %v1138, 3
        %vm1160 = vcmp.lt.s32.totalorder %v1138, 4
        %v1161 = vsel %vm1157, %v1141, %v1144
        %v1162 = vsel %vm1160, %v1150, 2102212464
        %v1163 = vsel %vm1159, %v1147, %v1162
        %v1164 = vsel %vm1158, %v1161, %v1163
        %v1165 = vsel %vm1157, %v1144, %v1147
        %v1166 = vsel %vm1160, %v1153, 920167782
        %v1167 = vsel %vm1159, %v1150, %v1166
        %v1168 = vsel %vm1158, %v1165, %v1167
        %v1169 = vsel %vm1157, %v1147, %v1150
        %v1170 = vsel %vm1160, %v1156, 1326507024
        %v1171 = vsel %vm1159, %v1153, %v1170
        %v1172 = vsel %vm1158, %v1169, %v1171
        %v1173 = vshll.u32 %v1133, 8
        %v1174 = vmul.u32.u64.compose %v1173, %v1172
        %v1175 = vextract.low.u32 %v1174
        %v1176 = vextract.high.u32 %v1174
        %v1177 = vmul.u32.u64.compose %v1173, %v1168
        %v1178 = vextract.low.u32 %v1177
        %v1179 = vextract.high.u32 %v1177
        %v1180 = vmul.u32 %v1173, %v1164
        %v1181 = vadd.s32 %v1176, %v1178
        %vm1182 = vc.u32 %v1176, %v1178
        %v1183 = vadd.s32 %v1179, 1
        %v1184 = vsel %vm1182, %v1183, %v1179
        %v1185 = vadd.s32 %v1180, %v1184
        %v1186 = vadd.s32 %v1185, 536870912
        %v1187 = vshrl.u32 %v1186, 30
        %v1188 = vshll.u32 %v1187, 30
        %v1189 = vsub.s32 %v1185, %v1188
        %vm1190 = vcmp.lt.s32.totalorder %v1189, 0
        %v1191 = vsub.s32 0, %v1189
        %v1192 = vsel %vm1190, %v1191, %v1189
        %v1193 = vclz %v1192
        %v1194 = vsub.s32 %v1193, 2
        %vm1195 = vcmp.gt.s32.totalorder 0, %v1194
        %v1196 = vsel %vm1195, 0, %v1194
        %v1197 = vsub.s32 32, %v1196
        %v1198 = vshll.u32 %v1189, %v1196
        %v1199 = vshrl.u32 %v1181, %v1197
        %v1200 = vor.u32 %v1198, %v1199
        %v1201 = vsub.s32 4294967266, %v1196
        %v1202 = vadd.s32 %v1201, 127
        %v1203 = vshll.u32 %v1202, 23
        %v1204 = vor.u32 4788187, %v1203
        %v1205 = vand.u32 2147483647, %v1204
        %v1207 = vcvt.s32.f32 %v1200
        %v1208 = vmul.f32 %v1207, %v1205
        %v1209 = vxor.u32 %v1208, 2147483648
        %v1210 = vsel %vm1127, %v1209, %v1208
        %v1211 = vsub.s32 4, %v1187
        %v1212 = vsel %vm1127, %v1211, %v1187
        %v1213 = vsel %vm1126, %v354, %v1210
        %v1214 = vsel %vm1126, 0, %v1212
        %v1215 = vcosq.f32.pop %v1213
        %v1216 = vsinq.f32.pop %v1213
        %vm1217 = vweird.f32 %v354
        %v1218 = vadd.s32 %v1214, 3
        %v1219 = vand.u32 %v1218, 3
        %vm1220 = vcmp.lt.s32.totalorder %v1219, 2
        %vm1221 = vcmp.eq.s32.totalorder %v1219, 0
        %v1222 = vxor.u32 %v1216, 2147483648
        %v1223 = vsel %vm1221, %v1215, %v1222
        %vm1224 = vcmp.eq.s32.totalorder %v1219, 2
        %v1225 = vxor.u32 %v1215, 2147483648
        %v1226 = vsel %vm1224, %v1225, %v1216
        %v1227 = vsel %vm1220, %v1223, %v1226
        %v1228 = vsel %vm1217, nan, %v1227
        %v1229 = vand.u32 2147483647, %v359
        %vm1230 = vcmp.le.f32.partialorder %v1229, 0.7853982
        %vm1231 = vcmp.lt.s32.totalorder %v359, 0
        %v1232 = vand.u32 %v359, 2139095040
        %v1233 = vshrl.u32 %v1232, 23
        %v1234 = vsub.s32 %v1233, 127
        %v1235 = vand.u32 2147483647, %v359
        %v1236 = vand.u32 %v1235, 8388607
        %v1237 = vor.u32 %v1236, 8388608
        %v1238 = vsub.s32 0, %v1237
        %v1239 = vadd.s32 %v1234, 1
        %vm1240 = vcmp.gt.s32.totalorder %v1239, 0
        %v1241 = vsel %vm1240, %v1239, 0
        %v1242 = vshrl.u32 %v1241, 5
        %v1243 = vand.u32 %v1241, 31
        %v1244 = vsub.s32 32, %v1243
        %v1245 = vshrl.u32 683565275, %v1244
        %v1246 = vshll.u32 683565275, %v1243
        %v1247 = vshrl.u32 2475754826, %v1244
        %v1248 = vor.u32 %v1246, %v1247
        %v1249 = vshll.u32 2475754826, %v1243
        %v1250 = vshrl.u32 2131351028, %v1244
        %v1251 = vor.u32 %v1249, %v1250
        %v1252 = vshll.u32 2131351028, %v1243
        %v1253 = vshrl.u32 2102212464, %v1244
        %v1254 = vor.u32 %v1252, %v1253
        %v1255 = vshll.u32 2102212464, %v1243
        %v1256 = vshrl.u32 920167782, %v1244
        %v1257 = vor.u32 %v1255, %v1256
        %v1258 = vshll.u32 920167782, %v1243
        %v1259 = vshrl.u32 1326507024, %v1244
        %v1260 = vor.u32 %v1258, %v1259
        %vm1261 = vcmp.lt.s32.totalorder %v1242, 1
        %vm1262 = vcmp.lt.s32.totalorder %v1242, 2
        %vm1263 = vcmp.lt.s32.totalorder %v1242, 3
        %vm1264 = vcmp.lt.s32.totalorder %v1242, 4
        %v1265 = vsel %vm1261, %v1245, %v1248
        %v1266 = vsel %vm1264, %v1254, 2102212464
        %v1267 = vsel %vm1263, %v1251, %v1266
        %v1268 = vsel %vm1262, %v1265, %v1267
        %v1269 = vsel %vm1261, %v1248, %v1251
        %v1270 = vsel %vm1264, %v1257, 920167782
        %v1271 = vsel %vm1263, %v1254, %v1270
        %v1272 = vsel %vm1262, %v1269, %v1271
        %v1273 = vsel %vm1261, %v1251, %v1254
        %v1274 = vsel %vm1264, %v1260, 1326507024
        %v1275 = vsel %vm1263, %v1257, %v1274
        %v1276 = vsel %vm1262, %v1273, %v1275
        %v1277 = vshll.u32 %v1237, 8
        %v1278 = vmul.u32.u64.compose %v1277, %v1276
        %v1279 = vextract.low.u32 %v1278
        %v1280 = vextract.high.u32 %v1278
        %v1281 = vmul.u32.u64.compose %v1277, %v1272
        %v1282 = vextract.low.u32 %v1281
        %v1283 = vextract.high.u32 %v1281
        %v1284 = vmul.u32 %v1277, %v1268
        %v1285 = vadd.s32 %v1280, %v1282
        %vm1286 = vc.u32 %v1280, %v1282
        %v1287 = vadd.s32 %v1283, 1
        %v1288 = vsel %vm1286, %v1287, %v1283
        %v1289 = vadd.s32 %v1284, %v1288
        %v1290 = vadd.s32 %v1289, 536870912
        %v1291 = vshrl.u32 %v1290, 30
        %v1292 = vshll.u32 %v1291, 30
        %v1293 = vsub.s32 %v1289, %v1292
        %vm1294 = vcmp.lt.s32.totalorder %v1293, 0
        %v1295 = vsub.s32 0, %v1293
        %v1296 = vsel %vm1294, %v1295, %v1293
        %v1297 = vclz %v1296
        %v1298 = vsub.s32 %v1297, 2
        %vm1299 = vcmp.gt.s32.totalorder 0, %v1298
        %v1300 = vsel %vm1299, 0, %v1298
        %v1301 = vsub.s32 32, %v1300
        %v1302 = vshll.u32 %v1293, %v1300
        %v1303 = vshrl.u32 %v1285, %v1301
        %v1304 = vor.u32 %v1302, %v1303
        %v1305 = vsub.s32 4294967266, %v1300
        %v1306 = vadd.s32 %v1305, 127
        %v1307 = vshll.u32 %v1306, 23
        %v1308 = vor.u32 4788187, %v1307
        %v1309 = vand.u32 2147483647, %v1308
        %v1311 = vcvt.s32.f32 %v1304
        %v1312 = vmul.f32 %v1311, %v1309
        %v1313 = vxor.u32 %v1312, 2147483648
        %v1314 = vsel %vm1231, %v1313, %v1312
        %v1315 = vsub.s32 4, %v1291
        %v1316 = vsel %vm1231, %v1315, %v1291
        %v1317 = vsel %vm1230, %v359, %v1314
        %v1318 = vsel %vm1230, 0, %v1316
        %v1319 = vcosq.f32.pop %v1317
        %v1320 = vsinq.f32.pop %v1317
        %vm1321 = vweird.f32 %v359
        %v1322 = vadd.s32 %v1318, 3
        %v1323 = vand.u32 %v1322, 3
        %vm1324 = vcmp.lt.s32.totalorder %v1323, 2
        %vm1325 = vcmp.eq.s32.totalorder %v1323, 0
        %v1326 = vxor.u32 %v1320, 2147483648
        %v1327 = vsel %vm1325, %v1319, %v1326
        %vm1328 = vcmp.eq.s32.totalorder %v1323, 2
        %v1329 = vxor.u32 %v1319, 2147483648
        %v1330 = vsel %vm1328, %v1329, %v1320
        %v1331 = vsel %vm1324, %v1327, %v1330
        %v1332 = vsel %vm1321, nan, %v1331
        %v1333 = vand.u32 2147483647, %v364
        %vm1334 = vcmp.le.f32.partialorder %v1333, 0.7853982
        %vm1335 = vcmp.lt.s32.totalorder %v364, 0
        %v1336 = vand.u32 %v364, 2139095040
        %v1337 = vshrl.u32 %v1336, 23
        %v1338 = vsub.s32 %v1337, 127
        %v1339 = vand.u32 2147483647, %v364
        %v1340 = vand.u32 %v1339, 8388607
        %v1341 = vor.u32 %v1340, 8388608
        %v1342 = vsub.s32 0, %v1341
        %v1343 = vadd.s32 %v1338, 1
        %vm1344 = vcmp.gt.s32.totalorder %v1343, 0
        %v1345 = vsel %vm1344, %v1343, 0
        %v1346 = vshrl.u32 %v1345, 5
        %v1347 = vand.u32 %v1345, 31
        %v1348 = vsub.s32 32, %v1347
        %v1349 = vshrl.u32 683565275, %v1348
        %v1350 = vshll.u32 683565275, %v1347
        %v1351 = vshrl.u32 2475754826, %v1348
        %v1352 = vor.u32 %v1350, %v1351
        %v1353 = vshll.u32 2475754826, %v1347
        %v1354 = vshrl.u32 2131351028, %v1348
        %v1355 = vor.u32 %v1353, %v1354
        %v1356 = vshll.u32 2131351028, %v1347
        %v1357 = vshrl.u32 2102212464, %v1348
        %v1358 = vor.u32 %v1356, %v1357
        %v1359 = vshll.u32 2102212464, %v1347
        %v1360 = vshrl.u32 920167782, %v1348
        %v1361 = vor.u32 %v1359, %v1360
        %v1362 = vshll.u32 920167782, %v1347
        %v1363 = vshrl.u32 1326507024, %v1348
        %v1364 = vor.u32 %v1362, %v1363
        %vm1365 = vcmp.lt.s32.totalorder %v1346, 1
        %vm1366 = vcmp.lt.s32.totalorder %v1346, 2
        %vm1367 = vcmp.lt.s32.totalorder %v1346, 3
        %vm1368 = vcmp.lt.s32.totalorder %v1346, 4
        %v1369 = vsel %vm1365, %v1349, %v1352
        %v1370 = vsel %vm1368, %v1358, 2102212464
        %v1371 = vsel %vm1367, %v1355, %v1370
        %v1372 = vsel %vm1366, %v1369, %v1371
        %v1373 = vsel %vm1365, %v1352, %v1355
        %v1374 = vsel %vm1368, %v1361, 920167782
        %v1375 = vsel %vm1367, %v1358, %v1374
        %v1376 = vsel %vm1366, %v1373, %v1375
        %v1377 = vsel %vm1365, %v1355, %v1358
        %v1378 = vsel %vm1368, %v1364, 1326507024
        %v1379 = vsel %vm1367, %v1361, %v1378
        %v1380 = vsel %vm1366, %v1377, %v1379
        %v1381 = vshll.u32 %v1341, 8
        %v1382 = vmul.u32.u64.compose %v1381, %v1380
        %v1383 = vextract.low.u32 %v1382
        %v1384 = vextract.high.u32 %v1382
        %v1385 = vmul.u32.u64.compose %v1381, %v1376
        %v1386 = vextract.low.u32 %v1385
        %v1387 = vextract.high.u32 %v1385
        %v1388 = vmul.u32 %v1381, %v1372
        %v1389 = vadd.s32 %v1384, %v1386
        %vm1390 = vc.u32 %v1384, %v1386
        %v1391 = vadd.s32 %v1387, 1
        %v1392 = vsel %vm1390, %v1391, %v1387
        %v1393 = vadd.s32 %v1388, %v1392
        %v1394 = vadd.s32 %v1393, 536870912
        %v1395 = vshrl.u32 %v1394, 30
        %v1396 = vshll.u32 %v1395, 30
        %v1397 = vsub.s32 %v1393, %v1396
        %vm1398 = vcmp.lt.s32.totalorder %v1397, 0
        %v1399 = vsub.s32 0, %v1397
        %v1400 = vsel %vm1398, %v1399, %v1397
        %v1401 = vclz %v1400
        %v1402 = vsub.s32 %v1401, 2
        %vm1403 = vcmp.gt.s32.totalorder 0, %v1402
        %v1404 = vsel %vm1403, 0, %v1402
        %v1405 = vsub.s32 32, %v1404
        %v1406 = vshll.u32 %v1397, %v1404
        %v1407 = vshrl.u32 %v1389, %v1405
        %v1408 = vor.u32 %v1406, %v1407
        %v1409 = vsub.s32 4294967266, %v1404
        %v1410 = vadd.s32 %v1409, 127
        %v1411 = vshll.u32 %v1410, 23
        %v1412 = vor.u32 4788187, %v1411
        %v1413 = vand.u32 2147483647, %v1412
        %v1415 = vcvt.s32.f32 %v1408
        %v1416 = vmul.f32 %v1415, %v1413
        %v1417 = vxor.u32 %v1416, 2147483648
        %v1418 = vsel %vm1335, %v1417, %v1416
        %v1419 = vsub.s32 4, %v1395
        %v1420 = vsel %vm1335, %v1419, %v1395
        %v1421 = vsel %vm1334, %v364, %v1418
        %v1422 = vsel %vm1334, 0, %v1420
        %v1423 = vcosq.f32.pop %v1421
        %v1424 = vsinq.f32.pop %v1421
        %vm1425 = vweird.f32 %v364
        %v1426 = vadd.s32 %v1422, 3
        %v1427 = vand.u32 %v1426, 3
        %vm1428 = vcmp.lt.s32.totalorder %v1427, 2
        %vm1429 = vcmp.eq.s32.totalorder %v1427, 0
        %v1430 = vxor.u32 %v1424, 2147483648
        %v1431 = vsel %vm1429, %v1423, %v1430
        %vm1432 = vcmp.eq.s32.totalorder %v1427, 2
        %v1433 = vxor.u32 %v1423, 2147483648
        %v1434 = vsel %vm1432, %v1433, %v1424
        %v1435 = vsel %vm1428, %v1431, %v1434
        %v1436 = vsel %vm1425, nan, %v1435
        %v1437 = vand.u32 2147483647, %v369
        %vm1438 = vcmp.le.f32.partialorder %v1437, 0.7853982
        %vm1439 = vcmp.lt.s32.totalorder %v369, 0
        %v1440 = vand.u32 %v369, 2139095040
        %v1441 = vshrl.u32 %v1440, 23
        %v1442 = vsub.s32 %v1441, 127
        %v1443 = vand.u32 2147483647, %v369
        %v1444 = vand.u32 %v1443, 8388607
        %v1445 = vor.u32 %v1444, 8388608
        %v1446 = vsub.s32 0, %v1445
        %v1447 = vadd.s32 %v1442, 1
        %vm1448 = vcmp.gt.s32.totalorder %v1447, 0
        %v1449 = vsel %vm1448, %v1447, 0
        %v1450 = vshrl.u32 %v1449, 5
        %v1451 = vand.u32 %v1449, 31
        %v1452 = vsub.s32 32, %v1451
        %v1453 = vshrl.u32 683565275, %v1452
        %v1454 = vshll.u32 683565275, %v1451
        %v1455 = vshrl.u32 2475754826, %v1452
        %v1456 = vor.u32 %v1454, %v1455
        %v1457 = vshll.u32 2475754826, %v1451
        %v1458 = vshrl.u32 2131351028, %v1452
        %v1459 = vor.u32 %v1457, %v1458
        %v1460 = vshll.u32 2131351028, %v1451
        %v1461 = vshrl.u32 2102212464, %v1452
        %v1462 = vor.u32 %v1460, %v1461
        %v1463 = vshll.u32 2102212464, %v1451
        %v1464 = vshrl.u32 920167782, %v1452
        %v1465 = vor.u32 %v1463, %v1464
        %v1466 = vshll.u32 920167782, %v1451
        %v1467 = vshrl.u32 1326507024, %v1452
        %v1468 = vor.u32 %v1466, %v1467
        %vm1469 = vcmp.lt.s32.totalorder %v1450, 1
        %vm1470 = vcmp.lt.s32.totalorder %v1450, 2
        %vm1471 = vcmp.lt.s32.totalorder %v1450, 3
        %vm1472 = vcmp.lt.s32.totalorder %v1450, 4
        %v1473 = vsel %vm1469, %v1453, %v1456
        %v1474 = vsel %vm1472, %v1462, 2102212464
        %v1475 = vsel %vm1471, %v1459, %v1474
        %v1476 = vsel %vm1470, %v1473, %v1475
        %v1477 = vsel %vm1469, %v1456, %v1459
        %v1478 = vsel %vm1472, %v1465, 920167782
        %v1479 = vsel %vm1471, %v1462, %v1478
        %v1480 = vsel %vm1470, %v1477, %v1479
        %v1481 = vsel %vm1469, %v1459, %v1462
        %v1482 = vsel %vm1472, %v1468, 1326507024
        %v1483 = vsel %vm1471, %v1465, %v1482
        %v1484 = vsel %vm1470, %v1481, %v1483
        %v1485 = vshll.u32 %v1445, 8
        %v1486 = vmul.u32.u64.compose %v1485, %v1484
        %v1487 = vextract.low.u32 %v1486
        %v1488 = vextract.high.u32 %v1486
        %v1489 = vmul.u32.u64.compose %v1485, %v1480
        %v1490 = vextract.low.u32 %v1489
        %v1491 = vextract.high.u32 %v1489
        %v1492 = vmul.u32 %v1485, %v1476
        %v1493 = vadd.s32 %v1488, %v1490
        %vm1494 = vc.u32 %v1488, %v1490
        %v1495 = vadd.s32 %v1491, 1
        %v1496 = vsel %vm1494, %v1495, %v1491
        %v1497 = vadd.s32 %v1492, %v1496
        %v1498 = vadd.s32 %v1497, 536870912
        %v1499 = vshrl.u32 %v1498, 30
        %v1500 = vshll.u32 %v1499, 30
        %v1501 = vsub.s32 %v1497, %v1500
        %vm1502 = vcmp.lt.s32.totalorder %v1501, 0
        %v1503 = vsub.s32 0, %v1501
        %v1504 = vsel %vm1502, %v1503, %v1501
        %v1505 = vclz %v1504
        %v1506 = vsub.s32 %v1505, 2
        %vm1507 = vcmp.gt.s32.totalorder 0, %v1506
        %v1508 = vsel %vm1507, 0, %v1506
        %v1509 = vsub.s32 32, %v1508
        %v1510 = vshll.u32 %v1501, %v1508
        %v1511 = vshrl.u32 %v1493, %v1509
        %v1512 = vor.u32 %v1510, %v1511
        %v1513 = vsub.s32 4294967266, %v1508
        %v1514 = vadd.s32 %v1513, 127
        %v1515 = vshll.u32 %v1514, 23
        %v1516 = vor.u32 4788187, %v1515
        %v1517 = vand.u32 2147483647, %v1516
        %v1519 = vcvt.s32.f32 %v1512
        %v1520 = vmul.f32 %v1519, %v1517
        %v1521 = vxor.u32 %v1520, 2147483648
        %v1522 = vsel %vm1439, %v1521, %v1520
        %v1523 = vsub.s32 4, %v1499
        %v1524 = vsel %vm1439, %v1523, %v1499
        %v1525 = vsel %vm1438, %v369, %v1522
        %v1526 = vsel %vm1438, 0, %v1524
        %v1527 = vcosq.f32.pop %v1525
        %v1528 = vsinq.f32.pop %v1525
        %vm1529 = vweird.f32 %v369
        %v1530 = vadd.s32 %v1526, 3
        %v1531 = vand.u32 %v1530, 3
        %vm1532 = vcmp.lt.s32.totalorder %v1531, 2
        %vm1533 = vcmp.eq.s32.totalorder %v1531, 0
        %v1534 = vxor.u32 %v1528, 2147483648
        %v1535 = vsel %vm1533, %v1527, %v1534
        %vm1536 = vcmp.eq.s32.totalorder %v1531, 2
        %v1537 = vxor.u32 %v1527, 2147483648
        %v1538 = vsel %vm1536, %v1537, %v1528
        %v1539 = vsel %vm1532, %v1535, %v1538
        %v1540 = vsel %vm1529, nan, %v1539
        %v1541 = vand.u32 2147483647, %v374
        %vm1542 = vcmp.le.f32.partialorder %v1541, 0.7853982
        %vm1543 = vcmp.lt.s32.totalorder %v374, 0
        %v1544 = vand.u32 %v374, 2139095040
        %v1545 = vshrl.u32 %v1544, 23
        %v1546 = vsub.s32 %v1545, 127
        %v1547 = vand.u32 2147483647, %v374
        %v1548 = vand.u32 %v1547, 8388607
        %v1549 = vor.u32 %v1548, 8388608
        %v1550 = vsub.s32 0, %v1549
        %v1551 = vadd.s32 %v1546, 1
        %vm1552 = vcmp.gt.s32.totalorder %v1551, 0
        %v1553 = vsel %vm1552, %v1551, 0
        %v1554 = vshrl.u32 %v1553, 5
        %v1555 = vand.u32 %v1553, 31
        %v1556 = vsub.s32 32, %v1555
        %v1557 = vshrl.u32 683565275, %v1556
        %v1558 = vshll.u32 683565275, %v1555
        %v1559 = vshrl.u32 2475754826, %v1556
        %v1560 = vor.u32 %v1558, %v1559
        %v1561 = vshll.u32 2475754826, %v1555
        %v1562 = vshrl.u32 2131351028, %v1556
        %v1563 = vor.u32 %v1561, %v1562
        %v1564 = vshll.u32 2131351028, %v1555
        %v1565 = vshrl.u32 2102212464, %v1556
        %v1566 = vor.u32 %v1564, %v1565
        %v1567 = vshll.u32 2102212464, %v1555
        %v1568 = vshrl.u32 920167782, %v1556
        %v1569 = vor.u32 %v1567, %v1568
        %v1570 = vshll.u32 920167782, %v1555
        %v1571 = vshrl.u32 1326507024, %v1556
        %v1572 = vor.u32 %v1570, %v1571
        %vm1573 = vcmp.lt.s32.totalorder %v1554, 1
        %vm1574 = vcmp.lt.s32.totalorder %v1554, 2
        %vm1575 = vcmp.lt.s32.totalorder %v1554, 3
        %vm1576 = vcmp.lt.s32.totalorder %v1554, 4
        %v1577 = vsel %vm1573, %v1557, %v1560
        %v1578 = vsel %vm1576, %v1566, 2102212464
        %v1579 = vsel %vm1575, %v1563, %v1578
        %v1580 = vsel %vm1574, %v1577, %v1579
        %v1581 = vsel %vm1573, %v1560, %v1563
        %v1582 = vsel %vm1576, %v1569, 920167782
        %v1583 = vsel %vm1575, %v1566, %v1582
        %v1584 = vsel %vm1574, %v1581, %v1583
        %v1585 = vsel %vm1573, %v1563, %v1566
        %v1586 = vsel %vm1576, %v1572, 1326507024
        %v1587 = vsel %vm1575, %v1569, %v1586
        %v1588 = vsel %vm1574, %v1585, %v1587
        %v1589 = vshll.u32 %v1549, 8
        %v1590 = vmul.u32.u64.compose %v1589, %v1588
        %v1591 = vextract.low.u32 %v1590
        %v1592 = vextract.high.u32 %v1590
        %v1593 = vmul.u32.u64.compose %v1589, %v1584
        %v1594 = vextract.low.u32 %v1593
        %v1595 = vextract.high.u32 %v1593
        %v1596 = vmul.u32 %v1589, %v1580
        %v1597 = vadd.s32 %v1592, %v1594
        %vm1598 = vc.u32 %v1592, %v1594
        %v1599 = vadd.s32 %v1595, 1
        %v1600 = vsel %vm1598, %v1599, %v1595
        %v1601 = vadd.s32 %v1596, %v1600
        %v1602 = vadd.s32 %v1601, 536870912
        %v1603 = vshrl.u32 %v1602, 30
        %v1604 = vshll.u32 %v1603, 30
        %v1605 = vsub.s32 %v1601, %v1604
        %vm1606 = vcmp.lt.s32.totalorder %v1605, 0
        %v1607 = vsub.s32 0, %v1605
        %v1608 = vsel %vm1606, %v1607, %v1605
        %v1609 = vclz %v1608
        %v1610 = vsub.s32 %v1609, 2
        %vm1611 = vcmp.gt.s32.totalorder 0, %v1610
        %v1612 = vsel %vm1611, 0, %v1610
        %v1613 = vsub.s32 32, %v1612
        %v1614 = vshll.u32 %v1605, %v1612
        %v1615 = vshrl.u32 %v1597, %v1613
        %v1616 = vor.u32 %v1614, %v1615
        %v1617 = vsub.s32 4294967266, %v1612
        %v1618 = vadd.s32 %v1617, 127
        %v1619 = vshll.u32 %v1618, 23
        %v1620 = vor.u32 4788187, %v1619
        %v1621 = vand.u32 2147483647, %v1620
        %v1623 = vcvt.s32.f32 %v1616
        %v1624 = vmul.f32 %v1623, %v1621
        %v1625 = vxor.u32 %v1624, 2147483648
        %v1626 = vsel %vm1543, %v1625, %v1624
        %v1627 = vsub.s32 4, %v1603
        %v1628 = vsel %vm1543, %v1627, %v1603
        %v1629 = vsel %vm1542, %v374, %v1626
        %v1630 = vsel %vm1542, 0, %v1628
        %v1631 = vcosq.f32.pop %v1629
        %v1632 = vsinq.f32.pop %v1629
        %vm1633 = vweird.f32 %v374
        %v1634 = vadd.s32 %v1630, 3
        %v1635 = vand.u32 %v1634, 3
        %vm1636 = vcmp.lt.s32.totalorder %v1635, 2
        %vm1637 = vcmp.eq.s32.totalorder %v1635, 0
        %v1638 = vxor.u32 %v1632, 2147483648
        %v1639 = vsel %vm1637, %v1631, %v1638
        %vm1640 = vcmp.eq.s32.totalorder %v1635, 2
        %v1641 = vxor.u32 %v1631, 2147483648
        %v1642 = vsel %vm1640, %v1641, %v1632
        %v1643 = vsel %vm1636, %v1639, %v1642
        %v1644 = vsel %vm1633, nan, %v1643
        %v1645 = vand.u32 2147483647, %v379
        %vm1646 = vcmp.le.f32.partialorder %v1645, 0.7853982
        %vm1647 = vcmp.lt.s32.totalorder %v379, 0
        %v1648 = vand.u32 %v379, 2139095040
        %v1649 = vshrl.u32 %v1648, 23
        %v1650 = vsub.s32 %v1649, 127
        %v1651 = vand.u32 2147483647, %v379
        %v1652 = vand.u32 %v1651, 8388607
        %v1653 = vor.u32 %v1652, 8388608
        %v1654 = vsub.s32 0, %v1653
        %v1655 = vadd.s32 %v1650, 1
        %vm1656 = vcmp.gt.s32.totalorder %v1655, 0
        %v1657 = vsel %vm1656, %v1655, 0
        %v1658 = vshrl.u32 %v1657, 5
        %v1659 = vand.u32 %v1657, 31
        %v1660 = vsub.s32 32, %v1659
        %v1661 = vshrl.u32 683565275, %v1660
        %v1662 = vshll.u32 683565275, %v1659
        %v1663 = vshrl.u32 2475754826, %v1660
        %v1664 = vor.u32 %v1662, %v1663
        %v1665 = vshll.u32 2475754826, %v1659
        %v1666 = vshrl.u32 2131351028, %v1660
        %v1667 = vor.u32 %v1665, %v1666
        %v1668 = vshll.u32 2131351028, %v1659
        %v1669 = vshrl.u32 2102212464, %v1660
        %v1670 = vor.u32 %v1668, %v1669
        %v1671 = vshll.u32 2102212464, %v1659
        %v1672 = vshrl.u32 920167782, %v1660
        %v1673 = vor.u32 %v1671, %v1672
        %v1674 = vshll.u32 920167782, %v1659
        %v1675 = vshrl.u32 1326507024, %v1660
        %v1676 = vor.u32 %v1674, %v1675
        %vm1677 = vcmp.lt.s32.totalorder %v1658, 1
        %vm1678 = vcmp.lt.s32.totalorder %v1658, 2
        %vm1679 = vcmp.lt.s32.totalorder %v1658, 3
        %vm1680 = vcmp.lt.s32.totalorder %v1658, 4
        %v1681 = vsel %vm1677, %v1661, %v1664
        %v1682 = vsel %vm1680, %v1670, 2102212464
        %v1683 = vsel %vm1679, %v1667, %v1682
        %v1684 = vsel %vm1678, %v1681, %v1683
        %v1685 = vsel %vm1677, %v1664, %v1667
        %v1686 = vsel %vm1680, %v1673, 920167782
        %v1687 = vsel %vm1679, %v1670, %v1686
        %v1688 = vsel %vm1678, %v1685, %v1687
        %v1689 = vsel %vm1677, %v1667, %v1670
        %v1690 = vsel %vm1680, %v1676, 1326507024
        %v1691 = vsel %vm1679, %v1673, %v1690
        %v1692 = vsel %vm1678, %v1689, %v1691
        %v1693 = vshll.u32 %v1653, 8
        %v1694 = vmul.u32.u64.compose %v1693, %v1692
        %v1695 = vextract.low.u32 %v1694
        %v1696 = vextract.high.u32 %v1694
        %v1697 = vmul.u32.u64.compose %v1693, %v1688
        %v1698 = vextract.low.u32 %v1697
        %v1699 = vextract.high.u32 %v1697
        %v1700 = vmul.u32 %v1693, %v1684
        %v1701 = vadd.s32 %v1696, %v1698
        %vm1702 = vc.u32 %v1696, %v1698
        %v1703 = vadd.s32 %v1699, 1
        %v1704 = vsel %vm1702, %v1703, %v1699
        %v1705 = vadd.s32 %v1700, %v1704
        %v1706 = vadd.s32 %v1705, 536870912
        %v1707 = vshrl.u32 %v1706, 30
        %v1708 = vshll.u32 %v1707, 30
        %v1709 = vsub.s32 %v1705, %v1708
        %vm1710 = vcmp.lt.s32.totalorder %v1709, 0
        %v1711 = vsub.s32 0, %v1709
        %v1712 = vsel %vm1710, %v1711, %v1709
        %v1713 = vclz %v1712
        %v1714 = vsub.s32 %v1713, 2
        %vm1715 = vcmp.gt.s32.totalorder 0, %v1714
        %v1716 = vsel %vm1715, 0, %v1714
        %v1717 = vsub.s32 32, %v1716
        %v1718 = vshll.u32 %v1709, %v1716
        %v1719 = vshrl.u32 %v1701, %v1717
        %v1720 = vor.u32 %v1718, %v1719
        %v1721 = vsub.s32 4294967266, %v1716
        %v1722 = vadd.s32 %v1721, 127
        %v1723 = vshll.u32 %v1722, 23
        %v1724 = vor.u32 4788187, %v1723
        %v1725 = vand.u32 2147483647, %v1724
        %v1727 = vcvt.s32.f32 %v1720
        %v1728 = vmul.f32 %v1727, %v1725
        %v1729 = vxor.u32 %v1728, 2147483648
        %v1730 = vsel %vm1647, %v1729, %v1728
        %v1731 = vsub.s32 4, %v1707
        %v1732 = vsel %vm1647, %v1731, %v1707
        %v1733 = vsel %vm1646, %v379, %v1730
        %v1734 = vsel %vm1646, 0, %v1732
        %v1735 = vcosq.f32.pop %v1733
        %v1736 = vsinq.f32.pop %v1733
        %vm1737 = vweird.f32 %v379
        %v1738 = vadd.s32 %v1734, 3
        %v1739 = vand.u32 %v1738, 3
        %vm1740 = vcmp.lt.s32.totalorder %v1739, 2
        %vm1741 = vcmp.eq.s32.totalorder %v1739, 0
        %v1742 = vxor.u32 %v1736, 2147483648
        %v1743 = vsel %vm1741, %v1735, %v1742
        %vm1744 = vcmp.eq.s32.totalorder %v1739, 2
        %v1745 = vxor.u32 %v1735, 2147483648
        %v1746 = vsel %vm1744, %v1745, %v1736
        %v1747 = vsel %vm1740, %v1743, %v1746
        %v1748 = vsel %vm1737, nan, %v1747
        %v1749 = vand.u32 2147483647, %v384
        %vm1750 = vcmp.le.f32.partialorder %v1749, 0.7853982
        %vm1751 = vcmp.lt.s32.totalorder %v384, 0
        %v1752 = vand.u32 %v384, 2139095040
        %v1753 = vshrl.u32 %v1752, 23
        %v1754 = vsub.s32 %v1753, 127
        %v1755 = vand.u32 2147483647, %v384
        %v1756 = vand.u32 %v1755, 8388607
        %v1757 = vor.u32 %v1756, 8388608
        %v1758 = vsub.s32 0, %v1757
        %v1759 = vadd.s32 %v1754, 1
        %vm1760 = vcmp.gt.s32.totalorder %v1759, 0
        %v1761 = vsel %vm1760, %v1759, 0
        %v1762 = vshrl.u32 %v1761, 5
        %v1763 = vand.u32 %v1761, 31
        %v1764 = vsub.s32 32, %v1763
        %v1765 = vshrl.u32 683565275, %v1764
        %v1766 = vshll.u32 683565275, %v1763
        %v1767 = vshrl.u32 2475754826, %v1764
        %v1768 = vor.u32 %v1766, %v1767
        %v1769 = vshll.u32 2475754826, %v1763
        %v1770 = vshrl.u32 2131351028, %v1764
        %v1771 = vor.u32 %v1769, %v1770
        %v1772 = vshll.u32 2131351028, %v1763
        %v1773 = vshrl.u32 2102212464, %v1764
        %v1774 = vor.u32 %v1772, %v1773
        %v1775 = vshll.u32 2102212464, %v1763
        %v1776 = vshrl.u32 920167782, %v1764
        %v1777 = vor.u32 %v1775, %v1776
        %v1778 = vshll.u32 920167782, %v1763
        %v1779 = vshrl.u32 1326507024, %v1764
        %v1780 = vor.u32 %v1778, %v1779
        %vm1781 = vcmp.lt.s32.totalorder %v1762, 1
        %vm1782 = vcmp.lt.s32.totalorder %v1762, 2
        %vm1783 = vcmp.lt.s32.totalorder %v1762, 3
        %vm1784 = vcmp.lt.s32.totalorder %v1762, 4
        %v1785 = vsel %vm1781, %v1765, %v1768
        %v1786 = vsel %vm1784, %v1774, 2102212464
        %v1787 = vsel %vm1783, %v1771, %v1786
        %v1788 = vsel %vm1782, %v1785, %v1787
        %v1789 = vsel %vm1781, %v1768, %v1771
        %v1790 = vsel %vm1784, %v1777, 920167782
        %v1791 = vsel %vm1783, %v1774, %v1790
        %v1792 = vsel %vm1782, %v1789, %v1791
        %v1793 = vsel %vm1781, %v1771, %v1774
        %v1794 = vsel %vm1784, %v1780, 1326507024
        %v1795 = vsel %vm1783, %v1777, %v1794
        %v1796 = vsel %vm1782, %v1793, %v1795
        %v1797 = vshll.u32 %v1757, 8
        %v1798 = vmul.u32.u64.compose %v1797, %v1796
        %v1799 = vextract.low.u32 %v1798
        %v1800 = vextract.high.u32 %v1798
        %v1801 = vmul.u32.u64.compose %v1797, %v1792
        %v1802 = vextract.low.u32 %v1801
        %v1803 = vextract.high.u32 %v1801
        %v1804 = vmul.u32 %v1797, %v1788
        %v1805 = vadd.s32 %v1800, %v1802
        %vm1806 = vc.u32 %v1800, %v1802
        %v1807 = vadd.s32 %v1803, 1
        %v1808 = vsel %vm1806, %v1807, %v1803
        %v1809 = vadd.s32 %v1804, %v1808
        %v1810 = vadd.s32 %v1809, 536870912
        %v1811 = vshrl.u32 %v1810, 30
        %v1812 = vshll.u32 %v1811, 30
        %v1813 = vsub.s32 %v1809, %v1812
        %vm1814 = vcmp.lt.s32.totalorder %v1813, 0
        %v1815 = vsub.s32 0, %v1813
        %v1816 = vsel %vm1814, %v1815, %v1813
        %v1817 = vclz %v1816
        %v1818 = vsub.s32 %v1817, 2
        %vm1819 = vcmp.gt.s32.totalorder 0, %v1818
        %v1820 = vsel %vm1819, 0, %v1818
        %v1821 = vsub.s32 32, %v1820
        %v1822 = vshll.u32 %v1813, %v1820
        %v1823 = vshrl.u32 %v1805, %v1821
        %v1824 = vor.u32 %v1822, %v1823
        %v1825 = vsub.s32 4294967266, %v1820
        %v1826 = vadd.s32 %v1825, 127
        %v1827 = vshll.u32 %v1826, 23
        %v1828 = vor.u32 4788187, %v1827
        %v1829 = vand.u32 2147483647, %v1828
        %v1831 = vcvt.s32.f32 %v1824
        %v1832 = vmul.f32 %v1831, %v1829
        %v1833 = vxor.u32 %v1832, 2147483648
        %v1834 = vsel %vm1751, %v1833, %v1832
        %v1835 = vsub.s32 4, %v1811
        %v1836 = vsel %vm1751, %v1835, %v1811
        %v1837 = vsel %vm1750, %v384, %v1834
        %v1838 = vsel %vm1750, 0, %v1836
        %v1839 = vcosq.f32.pop %v1837
        %v1840 = vsinq.f32.pop %v1837
        %vm1841 = vweird.f32 %v384
        %v1842 = vadd.s32 %v1838, 3
        %v1843 = vand.u32 %v1842, 3
        %vm1844 = vcmp.lt.s32.totalorder %v1843, 2
        %vm1845 = vcmp.eq.s32.totalorder %v1843, 0
        %v1846 = vxor.u32 %v1840, 2147483648
        %v1847 = vsel %vm1845, %v1839, %v1846
        %vm1848 = vcmp.eq.s32.totalorder %v1843, 2
        %v1849 = vxor.u32 %v1839, 2147483648
        %v1850 = vsel %vm1848, %v1849, %v1840
        %v1851 = vsel %vm1844, %v1847, %v1850
        %v1852 = vsel %vm1841, nan, %v1851
        %v1853 = vand.u32 2147483647, %v389
        %vm1854 = vcmp.le.f32.partialorder %v1853, 0.7853982
        %vm1855 = vcmp.lt.s32.totalorder %v389, 0
        %v1856 = vand.u32 %v389, 2139095040
        %v1857 = vshrl.u32 %v1856, 23
        %v1858 = vsub.s32 %v1857, 127
        %v1859 = vand.u32 2147483647, %v389
        %v1860 = vand.u32 %v1859, 8388607
        %v1861 = vor.u32 %v1860, 8388608
        %v1862 = vsub.s32 0, %v1861
        %v1863 = vadd.s32 %v1858, 1
        %vm1864 = vcmp.gt.s32.totalorder %v1863, 0
        %v1865 = vsel %vm1864, %v1863, 0
        %v1866 = vshrl.u32 %v1865, 5
        %v1867 = vand.u32 %v1865, 31
        %v1868 = vsub.s32 32, %v1867
        %v1869 = vshrl.u32 683565275, %v1868
        %v1870 = vshll.u32 683565275, %v1867
        %v1871 = vshrl.u32 2475754826, %v1868
        %v1872 = vor.u32 %v1870, %v1871
        %v1873 = vshll.u32 2475754826, %v1867
        %v1874 = vshrl.u32 2131351028, %v1868
        %v1875 = vor.u32 %v1873, %v1874
        %v1876 = vshll.u32 2131351028, %v1867
        %v1877 = vshrl.u32 2102212464, %v1868
        %v1878 = vor.u32 %v1876, %v1877
        %v1879 = vshll.u32 2102212464, %v1867
        %v1880 = vshrl.u32 920167782, %v1868
        %v1881 = vor.u32 %v1879, %v1880
        %v1882 = vshll.u32 920167782, %v1867
        %v1883 = vshrl.u32 1326507024, %v1868
        %v1884 = vor.u32 %v1882, %v1883
        %vm1885 = vcmp.lt.s32.totalorder %v1866, 1
        %vm1886 = vcmp.lt.s32.totalorder %v1866, 2
        %vm1887 = vcmp.lt.s32.totalorder %v1866, 3
        %vm1888 = vcmp.lt.s32.totalorder %v1866, 4
        %v1889 = vsel %vm1885, %v1869, %v1872
        %v1890 = vsel %vm1888, %v1878, 2102212464
        %v1891 = vsel %vm1887, %v1875, %v1890
        %v1892 = vsel %vm1886, %v1889, %v1891
        %v1893 = vsel %vm1885, %v1872, %v1875
        %v1894 = vsel %vm1888, %v1881, 920167782
        %v1895 = vsel %vm1887, %v1878, %v1894
        %v1896 = vsel %vm1886, %v1893, %v1895
        %v1897 = vsel %vm1885, %v1875, %v1878
        %v1898 = vsel %vm1888, %v1884, 1326507024
        %v1899 = vsel %vm1887, %v1881, %v1898
        %v1900 = vsel %vm1886, %v1897, %v1899
        %v1901 = vshll.u32 %v1861, 8
        %v1902 = vmul.u32.u64.compose %v1901, %v1900
        %v1903 = vextract.low.u32 %v1902
        %v1904 = vextract.high.u32 %v1902
        %v1905 = vmul.u32.u64.compose %v1901, %v1896
        %v1906 = vextract.low.u32 %v1905
        %v1907 = vextract.high.u32 %v1905
        %v1908 = vmul.u32 %v1901, %v1892
        %v1909 = vadd.s32 %v1904, %v1906
        %vm1910 = vc.u32 %v1904, %v1906
        %v1911 = vadd.s32 %v1907, 1
        %v1912 = vsel %vm1910, %v1911, %v1907
        %v1913 = vadd.s32 %v1908, %v1912
        %v1914 = vadd.s32 %v1913, 536870912
        %v1915 = vshrl.u32 %v1914, 30
        %v1916 = vshll.u32 %v1915, 30
        %v1917 = vsub.s32 %v1913, %v1916
        %vm1918 = vcmp.lt.s32.totalorder %v1917, 0
        %v1919 = vsub.s32 0, %v1917
        %v1920 = vsel %vm1918, %v1919, %v1917
        %v1921 = vclz %v1920
        %v1922 = vsub.s32 %v1921, 2
        %vm1923 = vcmp.gt.s32.totalorder 0, %v1922
        %v1924 = vsel %vm1923, 0, %v1922
        %v1925 = vsub.s32 32, %v1924
        %v1926 = vshll.u32 %v1917, %v1924
        %v1927 = vshrl.u32 %v1909, %v1925
        %v1928 = vor.u32 %v1926, %v1927
        %v1929 = vsub.s32 4294967266, %v1924
        %v1930 = vadd.s32 %v1929, 127
        %v1931 = vshll.u32 %v1930, 23
        %v1932 = vor.u32 4788187, %v1931
        %v1933 = vand.u32 2147483647, %v1932
        %v1935 = vcvt.s32.f32 %v1928
        %v1936 = vmul.f32 %v1935, %v1933
        %v1937 = vxor.u32 %v1936, 2147483648
        %v1938 = vsel %vm1855, %v1937, %v1936
        %v1939 = vsub.s32 4, %v1915
        %v1940 = vsel %vm1855, %v1939, %v1915
        %v1941 = vsel %vm1854, %v389, %v1938
        %v1942 = vsel %vm1854, 0, %v1940
        %v1943 = vcosq.f32.pop %v1941
        %v1944 = vsinq.f32.pop %v1941
        %vm1945 = vweird.f32 %v389
        %v1946 = vadd.s32 %v1942, 3
        %v1947 = vand.u32 %v1946, 3
        %vm1948 = vcmp.lt.s32.totalorder %v1947, 2
        %vm1949 = vcmp.eq.s32.totalorder %v1947, 0
        %v1950 = vxor.u32 %v1944, 2147483648
        %v1951 = vsel %vm1949, %v1943, %v1950
        %vm1952 = vcmp.eq.s32.totalorder %v1947, 2
        %v1953 = vxor.u32 %v1943, 2147483648
        %v1954 = vsel %vm1952, %v1953, %v1944
        %v1955 = vsel %vm1948, %v1951, %v1954
        %v1956 = vsel %vm1945, nan, %v1955
        %v1957 = vand.u32 2147483647, %v394
        %vm1958 = vcmp.le.f32.partialorder %v1957, 0.7853982
        %vm1959 = vcmp.lt.s32.totalorder %v394, 0
        %v1960 = vand.u32 %v394, 2139095040
        %v1961 = vshrl.u32 %v1960, 23
        %v1962 = vsub.s32 %v1961, 127
        %v1963 = vand.u32 2147483647, %v394
        %v1964 = vand.u32 %v1963, 8388607
        %v1965 = vor.u32 %v1964, 8388608
        %v1966 = vsub.s32 0, %v1965
        %v1967 = vadd.s32 %v1962, 1
        %vm1968 = vcmp.gt.s32.totalorder %v1967, 0
        %v1969 = vsel %vm1968, %v1967, 0
        %v1970 = vshrl.u32 %v1969, 5
        %v1971 = vand.u32 %v1969, 31
        %v1972 = vsub.s32 32, %v1971
        %v1973 = vshrl.u32 683565275, %v1972
        %v1974 = vshll.u32 683565275, %v1971
        %v1975 = vshrl.u32 2475754826, %v1972
        %v1976 = vor.u32 %v1974, %v1975
        %v1977 = vshll.u32 2475754826, %v1971
        %v1978 = vshrl.u32 2131351028, %v1972
        %v1979 = vor.u32 %v1977, %v1978
        %v1980 = vshll.u32 2131351028, %v1971
        %v1981 = vshrl.u32 2102212464, %v1972
        %v1982 = vor.u32 %v1980, %v1981
        %v1983 = vshll.u32 2102212464, %v1971
        %v1984 = vshrl.u32 920167782, %v1972
        %v1985 = vor.u32 %v1983, %v1984
        %v1986 = vshll.u32 920167782, %v1971
        %v1987 = vshrl.u32 1326507024, %v1972
        %v1988 = vor.u32 %v1986, %v1987
        %vm1989 = vcmp.lt.s32.totalorder %v1970, 1
        %vm1990 = vcmp.lt.s32.totalorder %v1970, 2
        %vm1991 = vcmp.lt.s32.totalorder %v1970, 3
        %vm1992 = vcmp.lt.s32.totalorder %v1970, 4
        %v1993 = vsel %vm1989, %v1973, %v1976
        %v1994 = vsel %vm1992, %v1982, 2102212464
        %v1995 = vsel %vm1991, %v1979, %v1994
        %v1996 = vsel %vm1990, %v1993, %v1995
        %v1997 = vsel %vm1989, %v1976, %v1979
        %v1998 = vsel %vm1992, %v1985, 920167782
        %v1999 = vsel %vm1991, %v1982, %v1998
        %v2000 = vsel %vm1990, %v1997, %v1999
        %v2001 = vsel %vm1989, %v1979, %v1982
        %v2002 = vsel %vm1992, %v1988, 1326507024
        %v2003 = vsel %vm1991, %v1985, %v2002
        %v2004 = vsel %vm1990, %v2001, %v2003
        %v2005 = vshll.u32 %v1965, 8
        %v2006 = vmul.u32.u64.compose %v2005, %v2004
        %v2007 = vextract.low.u32 %v2006
        %v2008 = vextract.high.u32 %v2006
        %v2009 = vmul.u32.u64.compose %v2005, %v2000
        %v2010 = vextract.low.u32 %v2009
        %v2011 = vextract.high.u32 %v2009
        %v2012 = vmul.u32 %v2005, %v1996
        %v2013 = vadd.s32 %v2008, %v2010
        %vm2014 = vc.u32 %v2008, %v2010
        %v2015 = vadd.s32 %v2011, 1
        %v2016 = vsel %vm2014, %v2015, %v2011
        %v2017 = vadd.s32 %v2012, %v2016
        %v2018 = vadd.s32 %v2017, 536870912
        %v2019 = vshrl.u32 %v2018, 30
        %v2020 = vshll.u32 %v2019, 30
        %v2021 = vsub.s32 %v2017, %v2020
        %vm2022 = vcmp.lt.s32.totalorder %v2021, 0
        %v2023 = vsub.s32 0, %v2021
        %v2024 = vsel %vm2022, %v2023, %v2021
        %v2025 = vclz %v2024
        %v2026 = vsub.s32 %v2025, 2
        %vm2027 = vcmp.gt.s32.totalorder 0, %v2026
        %v2028 = vsel %vm2027, 0, %v2026
        %v2029 = vsub.s32 32, %v2028
        %v2030 = vshll.u32 %v2021, %v2028
        %v2031 = vshrl.u32 %v2013, %v2029
        %v2032 = vor.u32 %v2030, %v2031
        %v2033 = vsub.s32 4294967266, %v2028
        %v2034 = vadd.s32 %v2033, 127
        %v2035 = vshll.u32 %v2034, 23
        %v2036 = vor.u32 4788187, %v2035
        %v2037 = vand.u32 2147483647, %v2036
        %v2039 = vcvt.s32.f32 %v2032
        %v2040 = vmul.f32 %v2039, %v2037
        %v2041 = vxor.u32 %v2040, 2147483648
        %v2042 = vsel %vm1959, %v2041, %v2040
        %v2043 = vsub.s32 4, %v2019
        %v2044 = vsel %vm1959, %v2043, %v2019
        %v2045 = vsel %vm1958, %v394, %v2042
        %v2046 = vsel %vm1958, 0, %v2044
        %v2047 = vcosq.f32.pop %v2045
        %v2048 = vsinq.f32.pop %v2045
        %vm2049 = vweird.f32 %v394
        %v2050 = vadd.s32 %v2046, 3
        %v2051 = vand.u32 %v2050, 3
        %vm2052 = vcmp.lt.s32.totalorder %v2051, 2
        %vm2053 = vcmp.eq.s32.totalorder %v2051, 0
        %v2054 = vxor.u32 %v2048, 2147483648
        %v2055 = vsel %vm2053, %v2047, %v2054
        %vm2056 = vcmp.eq.s32.totalorder %v2051, 2
        %v2057 = vxor.u32 %v2047, 2147483648
        %v2058 = vsel %vm2056, %v2057, %v2048
        %v2059 = vsel %vm2052, %v2055, %v2058
        %v2060 = vsel %vm2049, nan, %v2059
        %2061 = vst [vmem:[%s164] sm:$0xff] %v500
        %2062 = vst [vmem:[%s164 + $0x8] sm:$0xff] %v604
        %2063 = vst [vmem:[%s164 + $0x10] sm:$0xff] %v708
        %2064 = vst [vmem:[%s164 + $0x18] sm:$0xff] %v812
        %2065 = vst [vmem:[%s164 + $0x20] sm:$0xff] %v916
        %2066 = vst [vmem:[%s164 + $0x28] sm:$0xff] %v1020
        %2067 = vst [vmem:[%s164 + $0x30] sm:$0xff] %v1124
        %2068 = vst [vmem:[%s164 + $0x38] sm:$0xff] %v1228
        %2069 = vst [vmem:[%s164 + $0x40] sm:$0xff] %v1332
        %2070 = vst [vmem:[%s164 + $0x48] sm:$0xff] %v1436
        %2071 = vst [vmem:[%s164 + $0x50] sm:$0xff] %v1540
        %2072 = vst [vmem:[%s164 + $0x58] sm:$0xff] %v1644
        %2073 = vst [vmem:[%s164 + $0x60] sm:$0xff] %v1748
        %2074 = vst [vmem:[%s164 + $0x68] sm:$0xff] %v1852
        %2075 = vst [vmem:[%s164 + $0x70] sm:$0xff] %v1956
        %2076 = vst [vmem:[%s164 + $0x78] sm:$0xff] %v2060
        %s2077 = sand.u32 %s93, 1
        %s2078 = scalar_lea.sflag [#allocation3], %s2077
        %s2079 = sand.u32 %s93, 1
        %s2080 = smul.addr %s2079, 128
        %s2081 = scalar_lea.vmem [#allocation2], %s2080
        // Predicated region
        $region33: #{tpu_custom_call.1} parent=31 // pred_check
          %p2082 = pneg %p103
        $region34: #{tpu_custom_call.1} parent=31 // pred_check_branch
          %2084 = sbr.rel (%p2082) target = $region36
        $region35: #{tpu_custom_call.1} parent=31 // pred_region
          %s2085 = smul.u32 16, %s17
          %s2087 = ssub.s32 2048, 2048
          %2088 = vsyncadd %s2078, %s2087
          %s2089 = smul.addr %s2085, 128
          %s2090 = scalar_lea.hbm %s3, %s2089
          %s2091 = sshll.u32 %s2081, 4
          %s2092 = int_to_ptr.vmem [resolvable:$true] %s2091
          %2097 = dma.vmem_to_hbm [thread:$0]  %s2092, 2048, %s2090, %s2078, 128, 128, 8
        $region36: #{tpu_custom_call.1} parent=31 // pred_fallthru
          _
      $region32: #{tpu_custom_call.1} parent=5 // pred_fallthru
        _
      %p2098 = scmp.le.s32.totalorder 2, %s12
      // Predicated region
      $region37: #{tpu_custom_call.1} parent=5 // pred_check
        %p2099 = pneg %p2098
      $region38: #{tpu_custom_call.1} parent=5 // pred_check_branch
        %2101 = sbr.rel (%p2099) target = $region40
      $region39: #{tpu_custom_call.1} parent=5 // pred_region
        %s2102 = ssub.s32 %s12, 2
        // Predicated region
        $region41: #{tpu_custom_call.1} parent=39 // pred_check
          %p2103 = pneg %p109
        $region42: #{tpu_custom_call.1} parent=39 // pred_check_branch
          %2105 = sbr.rel (%p2103) target = $region44
        $region43: #{tpu_custom_call.1} parent=39 // pred_region
          %s2106 = sand.u32 %s94, 1
          %s2107 = scalar_lea.sflag [#allocation3], %s2106
          %s2108 = sand.u32 %s94, 1
          %s2109 = smul.addr %s2108, 128
          %s2110 = scalar_lea.vmem [#allocation2], %s2109
          %2111 = dma.done %s2107, 2048
        $region44: #{tpu_custom_call.1} parent=39 // pred_fallthru
          _
      $region40: #{tpu_custom_call.1} parent=5 // pred_fallthru
        _
    $region6: #{tpu_custom_call.1} parent=1 // loop_footer
      %s16 = sadd.s32 1, %s12
    $region7: #{tpu_custom_call.1} parent=1 // loop_footer_branch
      %11 = sbr.rel target = $region3
    $region8: #{tpu_custom_call.1} parent=1 // loop_exit
      _
    %2112 = vsyncpa [#allocation3], 1
    %s2113 = scalar_lea.sflag [#allocation3], 1
    %2114 = vsyncpa %s2113, 1

</llo_original>
